<compile_context>
chip_gen: v7x
topology: tpu7x:2x2x1
jax: 0.10.0
libtpu: 0.0.40
codegen_flags: <defaults>
</compile_context>

<pallas_src>
from functools import partial

import jax
import jax.numpy as jnp
from jax.experimental import pallas as pl
from jax.experimental.pallas import tpu as pltpu


# ----------------------------------------------------------------------------
# In-kernel helpers
# ----------------------------------------------------------------------------
def _gelu_tanh(x):
    # tanh-form GELU: the tanh runs on the EUP slot (VPU stays off the critical
    # path).  Max abs error vs torch.nn.GELU(approximate='none') is ~1e-3.
    c = 0.7978845608028654  # sqrt(2/pi)
    return 0.5 * x * (1.0 + jnp.tanh(c * (x + 0.044715 * x * x * x)))


def _layernorm(x, w, b, eps=1e-5):
    # Two-pass (centered) variance for numerical closeness to torch.LayerNorm.
    mu = jnp.mean(x, axis=-1, keepdims=True)
    d = x - mu
    var = jnp.mean(d * d, axis=-1, keepdims=True)
    return d * jax.lax.rsqrt(var + eps) * w + b


# ----------------------------------------------------------------------------
# Fused encoder kernel: grid = (batch_blocks, depth).
# res_ref (f32 VMEM scratch) carries the residual stream across the depth axis.
# ----------------------------------------------------------------------------
def encoder_kernel(x_ref,
                   ln1w_ref, ln1b_ref,
                   qkvw_ref,
                   pw_ref, pb_ref,
                   ln2w_ref, ln2b_ref,
                   fc1w_ref, fc1b_ref, fc2w_ref, fc2b_ref,
                   o_ref,
                   res_ref, attn_ref, *, num_heads):
    layer = pl.program_id(1)
    TB, N, D = x_ref.shape
    hd = D // num_heads

    # Layer 0: seed the f32 VMEM residual-stream carry from the HBM input block.
    @pl.when(layer == 0)
    def _():
        res_ref[...] = x_ref[...].astype(jnp.float32)

    x = res_ref[...]                                     # (TB, N, D) f32
    xf = x.reshape(TB * N, D)

    # ---- norm1 + multi-head self-attention ----
    xn = _layernorm(xf, ln1w_ref[0, 0], ln1b_ref[0, 0]).astype(jnp.bfloat16)

    # Single full-width QKV matmul (softmax scale pre-folded into Q columns).
    qkv = jnp.dot(xn, qkvw_ref[0],
                  preferred_element_type=jnp.float32)    # (TB*N, 3D)
    qkv = qkv.reshape(TB, N, 3 * D)

    # Per-head attention; each head writes its slab into a lane-dense scratch.
    for h in range(num_heads):                           # H is small (static)
        qh = qkv[:, :, h * hd:(h + 1) * hd].astype(jnp.bfloat16)
        kh = qkv[:, :, D + h * hd:D + (h + 1) * hd].astype(jnp.bfloat16)
        vh = qkv[:, :, 2 * D + h * hd:2 * D + (h + 1) * hd].astype(jnp.bfloat16)
        # scores: batched over TB, contract the head dim (no transpose op).
        s = jax.lax.dot_general(qh, kh, (((2,), (2,)), ((0,), (0,))),
                                preferred_element_type=jnp.float32)  # (TB,N,N)
        s = s - jnp.max(s, axis=-1, keepdims=True)
        p = jnp.exp(s)
        p = p * pl.reciprocal(jnp.sum(p, axis=-1, keepdims=True), approx=True)
        oh = jax.lax.dot_general(p.astype(jnp.bfloat16), vh,
                                 (((2,), (1,)), ((0,), (0,))),
                                 preferred_element_type=jnp.float32)  # (TB,N,hd)
        attn_ref[:, :, h * hd:(h + 1) * hd] = oh.astype(jnp.bfloat16)

    # Single full-width output projection.
    attn = jnp.dot(attn_ref[...].reshape(TB * N, D), pw_ref[0],
                   preferred_element_type=jnp.float32)   # (TB*N, D)
    xf = xf + attn + pb_ref[0, 0]                        # residual 1 (+bias)

    # ---- norm2 + MLP (GELU) ----
    xn2 = _layernorm(xf, ln2w_ref[0, 0], ln2b_ref[0, 0]).astype(jnp.bfloat16)
    h1 = (jnp.dot(xn2, fc1w_ref[0], preferred_element_type=jnp.float32)
          + fc1b_ref[0, 0])                              # (TB*N, F)
    h1 = _gelu_tanh(h1)
    h2 = (jnp.dot(h1.astype(jnp.bfloat16), fc2w_ref[0],
                  preferred_element_type=jnp.float32)
          + fc2b_ref[0, 0])                              # (TB*N, D)
    xf = xf + h2                                         # residual 2

    res_ref[...] = xf.reshape(TB, N, D)

    # Only the final layer materializes the HBM output block.
    @pl.when(layer == pl.num_programs(1) - 1)
    def _():
        o_ref[...] = res_ref[...].astype(o_ref.dtype)


# ----------------------------------------------------------------------------
# One-time parameter preprocessing (hoisted out of the per-call path):
# stacking, bf16 casts, folding the softmax scale into the Q weight columns.
# ----------------------------------------------------------------------------
def prepare_encoder_params(params, num_heads):
    depth = len(params)
    D = params[0]["qkv_w"].shape[0]
    hd = D // num_heads
    scale = float(hd) ** -0.5

    def stack(name):
        return jnp.stack([p[name] for p in params], axis=0)

    # qkv weight stored (in=D, out=3D); out columns are laid out (3, H, hd),
    # matching PyTorch's reshape(B, N, 3, H, hd).  Fold the softmax scale into
    # the Q columns, keep layout lane-dense (no (…, D, hd) slabs).
    qkv_w = stack("qkv_w")
    qkv_w = qkv_w.at[:, :, :D].multiply(scale).astype(jnp.bfloat16)   # (depth,D,3D)
    proj_w = stack("proj_w").astype(jnp.bfloat16)                     # (depth,D,D)
    fc1_w = stack("fc1_w").astype(jnp.bfloat16)                       # (depth,D,F)
    fc2_w = stack("fc2_w").astype(jnp.bfloat16)                       # (depth,F,D)
    F_hidden = fc1_w.shape[-1]

    def vec(name, width):
        # Keep the depth axis out of the (sublane, lane) dims: (depth, 1, width).
        return stack(name).reshape(depth, 1, width)

    weights = [
        vec("ln1_w", D), vec("ln1_b", D),
        qkv_w,
        proj_w, vec("proj_b", D),
        vec("ln2_w", D), vec("ln2_b", D),
        fc1_w, vec("fc1_b", F_hidden),
        fc2_w, vec("fc2_b", D),
    ]
    return dict(weights=weights, depth=depth, dim=D, num_heads=num_heads)


def _pick_batch_block(B, target):
    tb = 1
    for c in range(1, min(B, target) + 1):
        if B % c == 0:
            tb = c
    return tb


# ----------------------------------------------------------------------------
# Wrapper: one pallas_call for the whole encoder.
# ----------------------------------------------------------------------------
def transformer_encoder(x, pos, prepared, *, k=10, block_style="attn",
                        tb_target=8):
    # Mirrors TransformerEncoder.forward.  knn_point(pos, pos) is only consumed
    # by local-attention block styles; for pure 'attn' it is dead work.
    if pos is not None and block_style != "attn":
        _idx = knn_point(k, pos, pos)  # noqa: F841  (local-attn styles only)

    B, N, D = x.shape
    depth = prepared["depth"]
    num_heads = prepared["num_heads"]
    weights = prepared["weights"]

    # Batch blocking: amortize per-layer weight DMA over TB batch elements.
    # (On v7x, keep B//TB >= 2 where possible so both TensorCores get work.)
    TB = _pick_batch_block(B, tb_target)

    def wspec(w):
        rest = tuple(w.shape[1:])
        return pl.BlockSpec((1,) + rest,
                            lambda b, l, _n=len(rest): (l,) + (0,) * _n)

    return pl.pallas_call(
        partial(encoder_kernel, num_heads=num_heads),
        out_shape=jax.ShapeDtypeStruct((B, N, D), x.dtype),
        grid_spec=pltpu.PrefetchScalarGridSpec(
            num_scalar_prefetch=0,
            grid=(B // TB, depth),
            in_specs=[pl.BlockSpec((TB, N, D), lambda b, l: (b, 0, 0))]
                     + [wspec(w) for w in weights],
            out_specs=pl.BlockSpec((TB, N, D), lambda b, l: (b, 0, 0)),
            scratch_shapes=[
                pltpu.VMEM((TB, N, D), jnp.float32),    # f32 residual carry
                pltpu.VMEM((TB, N, D), jnp.bfloat16),   # per-head attn output
            ],
        ),
        input_output_aliases={0: 0},   # x and out share the HBM buffer
        compiler_params=pltpu.CompilerParams(
            dimension_semantics=("parallel", "arbitrary"),
            # Above the 16/32 MiB scoped defaults, within v7x's 64 MiB physical.
            vmem_limit_bytes=64 * 1024 * 1024),
    )(x, *weights)


# ----------------------------------------------------------------------------
# Plain-JAX glue: knn_point (local-attn styles only) and parameter init
# ----------------------------------------------------------------------------
def knn_point(k, xyz_q, xyz_k):
    d = jnp.sum((xyz_q[:, :, None, :] - xyz_k[:, None, :, :]) ** 2, axis=-1)
    _, idx = jax.lax.top_k(-d, k)
    return idx


def init_encoder_params(key, depth, dim, num_heads, mlp_ratio=4.0):
    hidden = int(dim * mlp_ratio)
    params = []
    for _ in range(depth):
        key, k0, k1, k2, k3 = jax.random.split(key, 5)
        params.append(dict(
            ln1_w=jnp.ones((dim,), jnp.float32),
            ln1_b=jnp.zeros((dim,), jnp.float32),
            # qkv_bias=False (module default) -> no qkv bias.
            # Weights stored as (in, out) so the kernel does x @ W directly
            # (equivalent to PyTorch's x @ W.T with W of shape (out, in)).
            qkv_w=0.02 * jax.random.normal(k0, (dim, 3 * dim), jnp.float32),
            proj_w=0.02 * jax.random.normal(k1, (dim, dim), jnp.float32),
            proj_b=jnp.zeros((dim,), jnp.float32),
            ln2_w=jnp.ones((dim,), jnp.float32),
            ln2_b=jnp.zeros((dim,), jnp.float32),
            fc1_w=0.02 * jax.random.normal(k2, (dim, hidden), jnp.float32),
            fc1_b=jnp.zeros((hidden,), jnp.float32),
            fc2_w=0.02 * jax.random.normal(k3, (hidden, dim), jnp.float32),
            fc2_b=jnp.zeros((dim,), jnp.float32),
        ))
    return params


# ----------------------------------------------------------------------------
if __name__ == "__main__":
    B, N, D = 2, 16, 32          # batch, tokens, embed_dim (small demo shapes)
    depth, num_heads, k = 2, 4, 10

    key = jax.random.PRNGKey(0)
    kx, kp, kw = jax.random.split(key, 3)
    x = jax.random.normal(kx, (B, N, D), jnp.float32)
    pos = jax.random.normal(kp, (B, N, 3), jnp.float32)

    params = init_encoder_params(kw, depth, D, num_heads, mlp_ratio=4.0)
    prepared = prepare_encoder_params(params, num_heads)   # one-time prep

    out = transformer_encoder(x, pos, prepared, k=k)
    out = jax.block_until_ready(out)
    assert out.shape == (B, N, D) and out.dtype == jnp.float32
    print("KERNEL_OK")
</pallas_src>

<mosaic_0001>
module attributes {stable_mosaic.version = 11 : i64} {
  func.func @encoder_kernel(%arg0: i32, %arg1: i32, %arg2: memref<2x16x32xf32, #tpu.memory_space<vmem>>, %arg3: memref<1x1x32xf32, #tpu.memory_space<vmem>>, %arg4: memref<1x1x32xf32, #tpu.memory_space<vmem>>, %arg5: memref<1x32x96xbf16, #tpu.memory_space<vmem>>, %arg6: memref<1x32x32xbf16, #tpu.memory_space<vmem>>, %arg7: memref<1x1x32xf32, #tpu.memory_space<vmem>>, %arg8: memref<1x1x32xf32, #tpu.memory_space<vmem>>, %arg9: memref<1x1x32xf32, #tpu.memory_space<vmem>>, %arg10: memref<1x32x128xbf16, #tpu.memory_space<vmem>>, %arg11: memref<1x1x128xf32, #tpu.memory_space<vmem>>, %arg12: memref<1x128x32xbf16, #tpu.memory_space<vmem>>, %arg13: memref<1x1x32xf32, #tpu.memory_space<vmem>>, %arg14: memref<2x16x32xf32, #tpu.memory_space<vmem>>, %arg15: memref<2x16x32xf32, #tpu.memory_space<vmem>>, %arg16: memref<2x16x32xbf16, #tpu.memory_space<vmem>>) attributes {dimension_semantics = [#tpu.dimension_semantics<parallel>, #tpu.dimension_semantics<arbitrary>], iteration_bounds = array<i64: 1, 2>, scalar_prefetch = 0 : i64, scratch_operands = 2 : i64, tpu.core_type = #tpu.core_type<tc>, window_params = [{transform_indices = @transform_0, window_bounds = array<i64: 2, 16, 32>}, {transform_indices = @transform_1, window_bounds = array<i64: 1, 1, 32>}, {transform_indices = @transform_2, window_bounds = array<i64: 1, 1, 32>}, {transform_indices = @transform_3, window_bounds = array<i64: 1, 32, 96>}, {transform_indices = @transform_4, window_bounds = array<i64: 1, 32, 32>}, {transform_indices = @transform_5, window_bounds = array<i64: 1, 1, 32>}, {transform_indices = @transform_6, window_bounds = array<i64: 1, 1, 32>}, {transform_indices = @transform_7, window_bounds = array<i64: 1, 1, 32>}, {transform_indices = @transform_8, window_bounds = array<i64: 1, 32, 128>}, {transform_indices = @transform_9, window_bounds = array<i64: 1, 1, 128>}, {transform_indices = @transform_10, window_bounds = array<i64: 1, 128, 32>}, {transform_indices = @transform_11, window_bounds = array<i64: 1, 1, 32>}, {transform_indices = @transform_12, window_bounds = array<i64: 2, 16, 32>}]} {
    %c0_i32 = arith.constant 0 : i32
    %0 = arith.cmpi eq, %arg1, %c0_i32 : i32
    %1 = arith.extui %0 : i1 to i32
    %c0_i32_0 = arith.constant 0 : i32
    %2 = arith.cmpi ne, %1, %c0_i32_0 : i32
    scf.if %2 {
      %c0_85 = arith.constant 0 : index
      %c0_86 = arith.constant 0 : index
      %c0_87 = arith.constant 0 : index
      %194 = vector.load %arg2[%c0_85, %c0_86, %c0_87] : memref<2x16x32xf32, #tpu.memory_space<vmem>>, vector<2x16x32xf32>
      %c0_88 = arith.constant 0 : index
      %c0_89 = arith.constant 0 : index
      %c0_90 = arith.constant 0 : index
      %195 = vector.load %arg15[%c0_88, %c0_89, %c0_90] : memref<2x16x32xf32, #tpu.memory_space<vmem>>, vector<2x16x32xf32>
      tpu.vector_store %arg15[%c0_88, %c0_89, %c0_90], %194 {strides = array<i32>} : memref<2x16x32xf32, #tpu.memory_space<vmem>>, vector<2x16x32xf32>,
    } else {
    }
    %c0 = arith.constant 0 : index
    %c0_1 = arith.constant 0 : index
    %c0_2 = arith.constant 0 : index
    %3 = vector.load %arg15[%c0, %c0_1, %c0_2] : memref<2x16x32xf32, #tpu.memory_space<vmem>>, vector<2x16x32xf32>
    %4 = vector.shape_cast %3 : vector<2x16x32xf32> to vector<32x32xf32>
    %c0_3 = arith.constant 0 : index
    %c0_4 = arith.constant 0 : index
    %c0_5 = arith.constant 0 : index
    %5 = vector.load %arg3[%c0_3, %c0_4, %c0_5] : memref<1x1x32xf32, #tpu.memory_space<vmem>>, vector<1x1x32xf32>
    %6 = vector.shape_cast %5 : vector<1x1x32xf32> to vector<32xf32>
    %c0_6 = arith.constant 0 : index
    %c0_7 = arith.constant 0 : index
    %c0_8 = arith.constant 0 : index
    %7 = vector.load %arg4[%c0_6, %c0_7, %c0_8] : memref<1x1x32xf32, #tpu.memory_space<vmem>>, vector<1x1x32xf32>
    %8 = vector.shape_cast %7 : vector<1x1x32xf32> to vector<32xf32>
    %cst = arith.constant dense<0.000000e+00> : vector<32xf32>
    %9 = vector.multi_reduction <add>, %4, %cst [1] : vector<32x32xf32> to vector<32xf32>
    %10 = vector.shape_cast %9 : vector<32xf32> to vector<32x1xf32>
    %cst_9 = arith.constant 3.200000e+01 : f32
    %11 = vector.broadcast %cst_9 : f32 to vector<32x1xf32>
    %12 = arith.divf %10, %11 : vector<32x1xf32>
    %13 = vector.broadcast %12 : vector<32x1xf32> to vector<32x32xf32>
    %14 = arith.subf %4, %13 : vector<32x32xf32>
    %15 = arith.mulf %14, %14 : vector<32x32xf32>
    %cst_10 = arith.constant dense<0.000000e+00> : vector<32xf32>
    %16 = vector.multi_reduction <add>, %15, %cst_10 [1] : vector<32x32xf32> to vector<32xf32>
    %17 = vector.shape_cast %16 : vector<32xf32> to vector<32x1xf32>
    %cst_11 = arith.constant 3.200000e+01 : f32
    %18 = vector.broadcast %cst_11 : f32 to vector<32x1xf32>
    %19 = arith.divf %17, %18 : vector<32x1xf32>
    %cst_12 = arith.constant 9.99999974E-6 : f32
    %20 = vector.broadcast %cst_12 : f32 to vector<32x1xf32>
    %21 = arith.addf %19, %20 : vector<32x1xf32>
    %22 = math.rsqrt %21 : vector<32x1xf32>
    %23 = vector.broadcast %22 : vector<32x1xf32> to vector<32x32xf32>
    %24 = arith.mulf %14, %23 : vector<32x32xf32>
    %25 = vector.shape_cast %6 : vector<32xf32> to vector<1x32xf32>
    %26 = vector.broadcast %25 : vector<1x32xf32> to vector<32x32xf32>
    %27 = arith.mulf %24, %26 : vector<32x32xf32>
    %28 = vector.shape_cast %8 : vector<32xf32> to vector<1x32xf32>
    %29 = vector.broadcast %28 : vector<1x32xf32> to vector<32x32xf32>
    %30 = arith.addf %27, %29 : vector<32x32xf32>
    %31 = arith.truncf %30 : vector<32x32xf32> to vector<32x32xbf16>
    %c0_13 = arith.constant 0 : index
    %c0_14 = arith.constant 0 : index
    %c0_15 = arith.constant 0 : index
    %32 = vector.load %arg5[%c0_13, %c0_14, %c0_15] : memref<1x32x96xbf16, #tpu.memory_space<vmem>>, vector<1x32x96xbf16>
    %33 = vector.shape_cast %32 : vector<1x32x96xbf16> to vector<32x96xbf16>
    %cst_16 = arith.constant dense<0.000000e+00> : vector<32x96xf32>
    %34 = tpu.matmul %31, %33, %cst_16 {dimension_numbers = #tpu.dot_dimension_numbers<[1], [0], [0], [1], [0, 0, 1, 1], [], []>} : vector<32x32xbf16>, vector<32x96xbf16>, vector<32x96xf32> -> vector<32x96xf32>
    %35 = vector.shape_cast %34 : vector<32x96xf32> to vector<2x16x96xf32>
    %36 = vector.extract_strided_slice %35 {offsets = [0, 0, 0], sizes = [2, 16, 8], strides = [1, 1, 1]} : vector<2x16x96xf32> to vector<2x16x8xf32>
    %37 = arith.truncf %36 : vector<2x16x8xf32> to vector<2x16x8xbf16>
    %38 = vector.extract_strided_slice %35 {offsets = [0, 0, 32], sizes = [2, 16, 8], strides = [1, 1, 1]} : vector<2x16x96xf32> to vector<2x16x8xf32>
    %39 = arith.truncf %38 : vector<2x16x8xf32> to vector<2x16x8xbf16>
    %40 = vector.extract_strided_slice %35 {offsets = [0, 0, 64], sizes = [2, 16, 8], strides = [1, 1, 1]} : vector<2x16x96xf32> to vector<2x16x8xf32>
    %41 = arith.truncf %40 : vector<2x16x8xf32> to vector<2x16x8xbf16>
    %cst_17 = arith.constant dense<0.000000e+00> : vector<2x16x16xf32>
    %42 = tpu.matmul %37, %39, %cst_17 {dimension_numbers = #tpu.dot_dimension_numbers<[2], [2], [1], [1], [0, 0, 0, 1, 1, 1], [0], [0]>} : vector<2x16x8xbf16>, vector<2x16x8xbf16>, vector<2x16x16xf32> -> vector<2x16x16xf32>
    %cst_18 = arith.constant dense<0xFF800000> : vector<2x16xf32>
    %43 = vector.multi_reduction <maximumf>, %42, %cst_18 [2] : vector<2x16x16xf32> to vector<2x16xf32>
    %44 = vector.shape_cast %43 : vector<2x16xf32> to vector<2x16x1xf32>
    %45 = vector.broadcast %44 : vector<2x16x1xf32> to vector<2x16x16xf32>
    %46 = arith.subf %42, %45 : vector<2x16x16xf32>
    %47 = math.exp %46 : vector<2x16x16xf32>
    %cst_19 = arith.constant dense<0.000000e+00> : vector<2x16xf32>
    %48 = vector.multi_reduction <add>, %47, %cst_19 [2] : vector<2x16x16xf32> to vector<2x16xf32>
    %49 = vector.shape_cast %48 : vector<2x16xf32> to vector<2x16x1xf32>
    %50 = tpu.reciprocal %49 {approx = true} : vector<2x16x1xf32> -> vector<2x16x1xf32>
    %51 = vector.broadcast %50 : vector<2x16x1xf32> to vector<2x16x16xf32>
    %52 = arith.mulf %47, %51 : vector<2x16x16xf32>
    %53 = arith.truncf %52 : vector<2x16x16xf32> to vector<2x16x16xbf16>
    %cst_20 = arith.constant dense<0.000000e+00> : vector<2x16x8xf32>
    %54 = tpu.matmul %53, %41, %cst_20 {dimension_numbers = #tpu.dot_dimension_numbers<[2], [1], [1], [2], [0, 0, 0, 1, 1, 2], [0], [0]>} : vector<2x16x16xbf16>, vector<2x16x8xbf16>, vector<2x16x8xf32> -> vector<2x16x8xf32>
    %55 = arith.truncf %54 : vector<2x16x8xf32> to vector<2x16x8xbf16>
    %c0_21 = arith.constant 0 : index
    %c0_22 = arith.constant 0 : index
    %c0_23 = arith.constant 0 : index
    %56 = vector.load %arg16[%c0_21, %c0_22, %c0_23] : memref<2x16x32xbf16, #tpu.memory_space<vmem>>, vector<2x16x8xbf16>
    tpu.vector_store %arg16[%c0_21, %c0_22, %c0_23], %55 {strides = array<i32>} : memref<2x16x32xbf16, #tpu.memory_space<vmem>>, vector<2x16x8xbf16>,
    %57 = vector.extract_strided_slice %35 {offsets = [0, 0, 8], sizes = [2, 16, 8], strides = [1, 1, 1]} : vector<2x16x96xf32> to vector<2x16x8xf32>
    %58 = arith.truncf %57 : vector<2x16x8xf32> to vector<2x16x8xbf16>
    %59 = vector.extract_strided_slice %35 {offsets = [0, 0, 40], sizes = [2, 16, 8], strides = [1, 1, 1]} : vector<2x16x96xf32> to vector<2x16x8xf32>
    %60 = arith.truncf %59 : vector<2x16x8xf32> to vector<2x16x8xbf16>
    %61 = vector.extract_strided_slice %35 {offsets = [0, 0, 72], sizes = [2, 16, 8], strides = [1, 1, 1]} : vector<2x16x96xf32> to vector<2x16x8xf32>
    %62 = arith.truncf %61 : vector<2x16x8xf32> to vector<2x16x8xbf16>
    %cst_24 = arith.constant dense<0.000000e+00> : vector<2x16x16xf32>
    %63 = tpu.matmul %58, %60, %cst_24 {dimension_numbers = #tpu.dot_dimension_numbers<[2], [2], [1], [1], [0, 0, 0, 1, 1, 1], [0], [0]>} : vector<2x16x8xbf16>, vector<2x16x8xbf16>, vector<2x16x16xf32> -> vector<2x16x16xf32>
    %cst_25 = arith.constant dense<0xFF800000> : vector<2x16xf32>
    %64 = vector.multi_reduction <maximumf>, %63, %cst_25 [2] : vector<2x16x16xf32> to vector<2x16xf32>
    %65 = vector.shape_cast %64 : vector<2x16xf32> to vector<2x16x1xf32>
    %66 = vector.broadcast %65 : vector<2x16x1xf32> to vector<2x16x16xf32>
    %67 = arith.subf %63, %66 : vector<2x16x16xf32>
    %68 = math.exp %67 : vector<2x16x16xf32>
    %cst_26 = arith.constant dense<0.000000e+00> : vector<2x16xf32>
    %69 = vector.multi_reduction <add>, %68, %cst_26 [2] : vector<2x16x16xf32> to vector<2x16xf32>
    %70 = vector.shape_cast %69 : vector<2x16xf32> to vector<2x16x1xf32>
    %71 = tpu.reciprocal %70 {approx = true} : vector<2x16x1xf32> -> vector<2x16x1xf32>
    %72 = vector.broadcast %71 : vector<2x16x1xf32> to vector<2x16x16xf32>
    %73 = arith.mulf %68, %72 : vector<2x16x16xf32>
    %74 = arith.truncf %73 : vector<2x16x16xf32> to vector<2x16x16xbf16>
    %cst_27 = arith.constant dense<0.000000e+00> : vector<2x16x8xf32>
    %75 = tpu.matmul %74, %62, %cst_27 {dimension_numbers = #tpu.dot_dimension_numbers<[2], [1], [1], [2], [0, 0, 0, 1, 1, 2], [0], [0]>} : vector<2x16x16xbf16>, vector<2x16x8xbf16>, vector<2x16x8xf32> -> vector<2x16x8xf32>
    %76 = arith.truncf %75 : vector<2x16x8xf32> to vector<2x16x8xbf16>
    %c0_28 = arith.constant 0 : index
    %c0_29 = arith.constant 0 : index
    %c8 = arith.constant 8 : index
    %77 = vector.load %arg16[%c0_28, %c0_29, %c8] : memref<2x16x32xbf16, #tpu.memory_space<vmem>>, vector<2x16x8xbf16>
    tpu.vector_store %arg16[%c0_28, %c0_29, %c8], %76 {strides = array<i32>} : memref<2x16x32xbf16, #tpu.memory_space<vmem>>, vector<2x16x8xbf16>,
    %78 = vector.extract_strided_slice %35 {offsets = [0, 0, 16], sizes = [2, 16, 8], strides = [1, 1, 1]} : vector<2x16x96xf32> to vector<2x16x8xf32>
    %79 = arith.truncf %78 : vector<2x16x8xf32> to vector<2x16x8xbf16>
    %80 = vector.extract_strided_slice %35 {offsets = [0, 0, 48], sizes = [2, 16, 8], strides = [1, 1, 1]} : vector<2x16x96xf32> to vector<2x16x8xf32>
    %81 = arith.truncf %80 : vector<2x16x8xf32> to vector<2x16x8xbf16>
    %82 = vector.extract_strided_slice %35 {offsets = [0, 0, 80], sizes = [2, 16, 8], strides = [1, 1, 1]} : vector<2x16x96xf32> to vector<2x16x8xf32>
    %83 = arith.truncf %82 : vector<2x16x8xf32> to vector<2x16x8xbf16>
    %cst_30 = arith.constant dense<0.000000e+00> : vector<2x16x16xf32>
    %84 = tpu.matmul %79, %81, %cst_30 {dimension_numbers = #tpu.dot_dimension_numbers<[2], [2], [1], [1], [0, 0, 0, 1, 1, 1], [0], [0]>} : vector<2x16x8xbf16>, vector<2x16x8xbf16>, vector<2x16x16xf32> -> vector<2x16x16xf32>
    %cst_31 = arith.constant dense<0xFF800000> : vector<2x16xf32>
    %85 = vector.multi_reduction <maximumf>, %84, %cst_31 [2] : vector<2x16x16xf32> to vector<2x16xf32>
    %86 = vector.shape_cast %85 : vector<2x16xf32> to vector<2x16x1xf32>
    %87 = vector.broadcast %86 : vector<2x16x1xf32> to vector<2x16x16xf32>
    %88 = arith.subf %84, %87 : vector<2x16x16xf32>
    %89 = math.exp %88 : vector<2x16x16xf32>
    %cst_32 = arith.constant dense<0.000000e+00> : vector<2x16xf32>
    %90 = vector.multi_reduction <add>, %89, %cst_32 [2] : vector<2x16x16xf32> to vector<2x16xf32>
    %91 = vector.shape_cast %90 : vector<2x16xf32> to vector<2x16x1xf32>
    %92 = tpu.reciprocal %91 {approx = true} : vector<2x16x1xf32> -> vector<2x16x1xf32>
    %93 = vector.broadcast %92 : vector<2x16x1xf32> to vector<2x16x16xf32>
    %94 = arith.mulf %89, %93 : vector<2x16x16xf32>
    %95 = arith.truncf %94 : vector<2x16x16xf32> to vector<2x16x16xbf16>
    %cst_33 = arith.constant dense<0.000000e+00> : vector<2x16x8xf32>
    %96 = tpu.matmul %95, %83, %cst_33 {dimension_numbers = #tpu.dot_dimension_numbers<[2], [1], [1], [2], [0, 0, 0, 1, 1, 2], [0], [0]>} : vector<2x16x16xbf16>, vector<2x16x8xbf16>, vector<2x16x8xf32> -> vector<2x16x8xf32>
    %97 = arith.truncf %96 : vector<2x16x8xf32> to vector<2x16x8xbf16>
    %c0_34 = arith.constant 0 : index
    %c0_35 = arith.constant 0 : index
    %c16 = arith.constant 16 : index
    %98 = vector.load %arg16[%c0_34, %c0_35, %c16] : memref<2x16x32xbf16, #tpu.memory_space<vmem>>, vector<2x16x8xbf16>
    tpu.vector_store %arg16[%c0_34, %c0_35, %c16], %97 {strides = array<i32>} : memref<2x16x32xbf16, #tpu.memory_space<vmem>>, vector<2x16x8xbf16>,
    %99 = vector.extract_strided_slice %35 {offsets = [0, 0, 24], sizes = [2, 16, 8], strides = [1, 1, 1]} : vector<2x16x96xf32> to vector<2x16x8xf32>
    %100 = arith.truncf %99 : vector<2x16x8xf32> to vector<2x16x8xbf16>
    %101 = vector.extract_strided_slice %35 {offsets = [0, 0, 56], sizes = [2, 16, 8], strides = [1, 1, 1]} : vector<2x16x96xf32> to vector<2x16x8xf32>
    %102 = arith.truncf %101 : vector<2x16x8xf32> to vector<2x16x8xbf16>
    %103 = vector.extract_strided_slice %35 {offsets = [0, 0, 88], sizes = [2, 16, 8], strides = [1, 1, 1]} : vector<2x16x96xf32> to vector<2x16x8xf32>
    %104 = arith.truncf %103 : vector<2x16x8xf32> to vector<2x16x8xbf16>
    %cst_36 = arith.constant dense<0.000000e+00> : vector<2x16x16xf32>
    %105 = tpu.matmul %100, %102, %cst_36 {dimension_numbers = #tpu.dot_dimension_numbers<[2], [2], [1], [1], [0, 0, 0, 1, 1, 1], [0], [0]>} : vector<2x16x8xbf16>, vector<2x16x8xbf16>, vector<2x16x16xf32> -> vector<2x16x16xf32>
    %cst_37 = arith.constant dense<0xFF800000> : vector<2x16xf32>
    %106 = vector.multi_reduction <maximumf>, %105, %cst_37 [2] : vector<2x16x16xf32> to vector<2x16xf32>
    %107 = vector.shape_cast %106 : vector<2x16xf32> to vector<2x16x1xf32>
    %108 = vector.broadcast %107 : vector<2x16x1xf32> to vector<2x16x16xf32>
    %109 = arith.subf %105, %108 : vector<2x16x16xf32>
    %110 = math.exp %109 : vector<2x16x16xf32>
    %cst_38 = arith.constant dense<0.000000e+00> : vector<2x16xf32>
    %111 = vector.multi_reduction <add>, %110, %cst_38 [2] : vector<2x16x16xf32> to vector<2x16xf32>
    %112 = vector.shape_cast %111 : vector<2x16xf32> to vector<2x16x1xf32>
    %113 = tpu.reciprocal %112 {approx = true} : vector<2x16x1xf32> -> vector<2x16x1xf32>
    %114 = vector.broadcast %113 : vector<2x16x1xf32> to vector<2x16x16xf32>
    %115 = arith.mulf %110, %114 : vector<2x16x16xf32>
    %116 = arith.truncf %115 : vector<2x16x16xf32> to vector<2x16x16xbf16>
    %cst_39 = arith.constant dense<0.000000e+00> : vector<2x16x8xf32>
    %117 = tpu.matmul %116, %104, %cst_39 {dimension_numbers = #tpu.dot_dimension_numbers<[2], [1], [1], [2], [0, 0, 0, 1, 1, 2], [0], [0]>} : vector<2x16x16xbf16>, vector<2x16x8xbf16>, vector<2x16x8xf32> -> vector<2x16x8xf32>
    %118 = arith.truncf %117 : vector<2x16x8xf32> to vector<2x16x8xbf16>
    %c0_40 = arith.constant 0 : index
    %c0_41 = arith.constant 0 : index
    %c24 = arith.constant 24 : index
    %119 = vector.load %arg16[%c0_40, %c0_41, %c24] : memref<2x16x32xbf16, #tpu.memory_space<vmem>>, vector<2x16x8xbf16>
    tpu.vector_store %arg16[%c0_40, %c0_41, %c24], %118 {strides = array<i32>} : memref<2x16x32xbf16, #tpu.memory_space<vmem>>, vector<2x16x8xbf16>,
    %c0_42 = arith.constant 0 : index
    %c0_43 = arith.constant 0 : index
    %c0_44 = arith.constant 0 : index
    %120 = vector.load %arg16[%c0_42, %c0_43, %c0_44] : memref<2x16x32xbf16, #tpu.memory_space<vmem>>, vector<2x16x32xbf16>
    %121 = vector.shape_cast %120 : vector<2x16x32xbf16> to vector<32x32xbf16>
    %c0_45 = arith.constant 0 : index
    %c0_46 = arith.constant 0 : index
    %c0_47 = arith.constant 0 : index
    %122 = vector.load %arg6[%c0_45, %c0_46, %c0_47] : memref<1x32x32xbf16, #tpu.memory_space<vmem>>, vector<1x32x32xbf16>
    %123 = vector.shape_cast %122 : vector<1x32x32xbf16> to vector<32x32xbf16>
    %cst_48 = arith.constant dense<0.000000e+00> : vector<32x32xf32>
    %124 = tpu.matmul %121, %123, %cst_48 {dimension_numbers = #tpu.dot_dimension_numbers<[1], [0], [0], [1], [0, 0, 1, 1], [], []>} : vector<32x32xbf16>, vector<32x32xbf16>, vector<32x32xf32> -> vector<32x32xf32>
    %125 = arith.addf %4, %124 : vector<32x32xf32>
    %c0_49 = arith.constant 0 : index
    %c0_50 = arith.constant 0 : index
    %c0_51 = arith.constant 0 : index
    %126 = vector.load %arg7[%c0_49, %c0_50, %c0_51] : memref<1x1x32xf32, #tpu.memory_space<vmem>>, vector<1x1x32xf32>
    %127 = vector.shape_cast %126 : vector<1x1x32xf32> to vector<32xf32>
    %128 = vector.shape_cast %127 : vector<32xf32> to vector<1x32xf32>
    %129 = vector.broadcast %128 : vector<1x32xf32> to vector<32x32xf32>
    %130 = arith.addf %125, %129 : vector<32x32xf32>
    %c0_52 = arith.constant 0 : index
    %c0_53 = arith.constant 0 : index
    %c0_54 = arith.constant 0 : index
    %131 = vector.load %arg8[%c0_52, %c0_53, %c0_54] : memref<1x1x32xf32, #tpu.memory_space<vmem>>, vector<1x1x32xf32>
    %132 = vector.shape_cast %131 : vector<1x1x32xf32> to vector<32xf32>
    %c0_55 = arith.constant 0 : index
    %c0_56 = arith.constant 0 : index
    %c0_57 = arith.constant 0 : index
    %133 = vector.load %arg9[%c0_55, %c0_56, %c0_57] : memref<1x1x32xf32, #tpu.memory_space<vmem>>, vector<1x1x32xf32>
    %134 = vector.shape_cast %133 : vector<1x1x32xf32> to vector<32xf32>
    %cst_58 = arith.constant dense<0.000000e+00> : vector<32xf32>
    %135 = vector.multi_reduction <add>, %130, %cst_58 [1] : vector<32x32xf32> to vector<32xf32>
    %136 = vector.shape_cast %135 : vector<32xf32> to vector<32x1xf32>
    %cst_59 = arith.constant 3.200000e+01 : f32
    %137 = vector.broadcast %cst_59 : f32 to vector<32x1xf32>
    %138 = arith.divf %136, %137 : vector<32x1xf32>
    %139 = vector.broadcast %138 : vector<32x1xf32> to vector<32x32xf32>
    %140 = arith.subf %130, %139 : vector<32x32xf32>
    %141 = arith.mulf %140, %140 : vector<32x32xf32>
    %cst_60 = arith.constant dense<0.000000e+00> : vector<32xf32>
    %142 = vector.multi_reduction <add>, %141, %cst_60 [1] : vector<32x32xf32> to vector<32xf32>
    %143 = vector.shape_cast %142 : vector<32xf32> to vector<32x1xf32>
    %cst_61 = arith.constant 3.200000e+01 : f32
    %144 = vector.broadcast %cst_61 : f32 to vector<32x1xf32>
    %145 = arith.divf %143, %144 : vector<32x1xf32>
    %cst_62 = arith.constant 9.99999974E-6 : f32
    %146 = vector.broadcast %cst_62 : f32 to vector<32x1xf32>
    %147 = arith.addf %145, %146 : vector<32x1xf32>
    %148 = math.rsqrt %147 : vector<32x1xf32>
    %149 = vector.broadcast %148 : vector<32x1xf32> to vector<32x32xf32>
    %150 = arith.mulf %140, %149 : vector<32x32xf32>
    %151 = vector.shape_cast %132 : vector<32xf32> to vector<1x32xf32>
    %152 = vector.broadcast %151 : vector<1x32xf32> to vector<32x32xf32>
    %153 = arith.mulf %150, %152 : vector<32x32xf32>
    %154 = vector.shape_cast %134 : vector<32xf32> to vector<1x32xf32>
    %155 = vector.broadcast %154 : vector<1x32xf32> to vector<32x32xf32>
    %156 = arith.addf %153, %155 : vector<32x32xf32>
    %157 = arith.truncf %156 : vector<32x32xf32> to vector<32x32xbf16>
    %c0_63 = arith.constant 0 : index
    %c0_64 = arith.constant 0 : index
    %c0_65 = arith.constant 0 : index
    %158 = vector.load %arg10[%c0_63, %c0_64, %c0_65] : memref<1x32x128xbf16, #tpu.memory_space<vmem>>, vector<1x32x128xbf16>
    %159 = vector.shape_cast %158 : vector<1x32x128xbf16> to vector<32x128xbf16>
    %cst_66 = arith.constant dense<0.000000e+00> : vector<32x128xf32>
    %160 = tpu.matmul %157, %159, %cst_66 {dimension_numbers = #tpu.dot_dimension_numbers<[1], [0], [0], [1], [0, 0, 1, 1], [], []>} : vector<32x32xbf16>, vector<32x128xbf16>, vector<32x128xf32> -> vector<32x128xf32>
    %c0_67 = arith.constant 0 : index
    %c0_68 = arith.constant 0 : index
    %c0_69 = arith.constant 0 : index
    %161 = vector.load %arg11[%c0_67, %c0_68, %c0_69] : memref<1x1x128xf32, #tpu.memory_space<vmem>>, vector<1x1x128xf32>
    %162 = vector.shape_cast %161 : vector<1x1x128xf32> to vector<128xf32>
    %163 = vector.shape_cast %162 : vector<128xf32> to vector<1x128xf32>
    %164 = vector.broadcast %163 : vector<1x128xf32> to vector<32x128xf32>
    %165 = arith.addf %160, %164 : vector<32x128xf32>
    %cst_70 = arith.constant 5.000000e-01 : f32
    %166 = vector.broadcast %cst_70 : f32 to vector<32x128xf32>
    %167 = arith.mulf %166, %165 : vector<32x128xf32>
    %cst_71 = arith.constant 4.471500e-02 : f32
    %168 = vector.broadcast %cst_71 : f32 to vector<32x128xf32>
    %169 = arith.mulf %168, %165 : vector<32x128xf32>
    %170 = arith.mulf %169, %165 : vector<32x128xf32>
    %171 = arith.mulf %170, %165 : vector<32x128xf32>
    %172 = arith.addf %165, %171 : vector<32x128xf32>
    %cst_72 = arith.constant 0.797884583 : f32
    %173 = vector.broadcast %cst_72 : f32 to vector<32x128xf32>
    %174 = arith.mulf %173, %172 : vector<32x128xf32>
    %175 = math.tanh %174 : vector<32x128xf32>
    %cst_73 = arith.constant 1.000000e+00 : f32
    %176 = vector.broadcast %cst_73 : f32 to vector<32x128xf32>
    %177 = arith.addf %176, %175 : vector<32x128xf32>
    %178 = arith.mulf %167, %177 : vector<32x128xf32>
    %179 = arith.truncf %178 : vector<32x128xf32> to vector<32x128xbf16>
    %c0_74 = arith.constant 0 : index
    %c0_75 = arith.constant 0 : index
    %c0_76 = arith.constant 0 : index
    %180 = vector.load %arg12[%c0_74, %c0_75, %c0_76] : memref<1x128x32xbf16, #tpu.memory_space<vmem>>, vector<1x128x32xbf16>
    %181 = vector.shape_cast %180 : vector<1x128x32xbf16> to vector<128x32xbf16>
    %cst_77 = arith.constant dense<0.000000e+00> : vector<32x32xf32>
    %182 = tpu.matmul %179, %181, %cst_77 {dimension_numbers = #tpu.dot_dimension_numbers<[1], [0], [0], [1], [0, 0, 1, 1], [], []>} : vector<32x128xbf16>, vector<128x32xbf16>, vector<32x32xf32> -> vector<32x32xf32>
    %c0_78 = arith.constant 0 : index
    %c0_79 = arith.constant 0 : index
    %c0_80 = arith.constant 0 : index
    %183 = vector.load %arg13[%c0_78, %c0_79, %c0_80] : memref<1x1x32xf32, #tpu.memory_space<vmem>>, vector<1x1x32xf32>
    %184 = vector.shape_cast %183 : vector<1x1x32xf32> to vector<32xf32>
    %185 = vector.shape_cast %184 : vector<32xf32> to vector<1x32xf32>
    %186 = vector.broadcast %185 : vector<1x32xf32> to vector<32x32xf32>
    %187 = arith.addf %182, %186 : vector<32x32xf32>
    %188 = arith.addf %130, %187 : vector<32x32xf32>
    %189 = vector.shape_cast %188 : vector<32x32xf32> to vector<2x16x32xf32>
    %c0_81 = arith.constant 0 : index
    %c0_82 = arith.constant 0 : index
    %c0_83 = arith.constant 0 : index
    %190 = vector.load %arg15[%c0_81, %c0_82, %c0_83] : memref<2x16x32xf32, #tpu.memory_space<vmem>>, vector<2x16x32xf32>
    tpu.vector_store %arg15[%c0_81, %c0_82, %c0_83], %189 {strides = array<i32>} : memref<2x16x32xf32, #tpu.memory_space<vmem>>, vector<2x16x32xf32>,
    %c1_i32 = arith.constant 1 : i32
    %191 = arith.cmpi eq, %arg1, %c1_i32 : i32
    %192 = arith.extui %191 : i1 to i32
    %c0_i32_84 = arith.constant 0 : i32
    %193 = arith.cmpi ne, %192, %c0_i32_84 : i32
    scf.if %193 {
      %c0_85 = arith.constant 0 : index
      %c0_86 = arith.constant 0 : index
      %c0_87 = arith.constant 0 : index
      %194 = vector.load %arg15[%c0_85, %c0_86, %c0_87] : memref<2x16x32xf32, #tpu.memory_space<vmem>>, vector<2x16x32xf32>
      %c0_88 = arith.constant 0 : index
      %c0_89 = arith.constant 0 : index
      %c0_90 = arith.constant 0 : index
      %195 = vector.load %arg14[%c0_88, %c0_89, %c0_90] : memref<2x16x32xf32, #tpu.memory_space<vmem>>, vector<2x16x32xf32>
      tpu.vector_store %arg14[%c0_88, %c0_89, %c0_90], %194 {strides = array<i32>} : memref<2x16x32xf32, #tpu.memory_space<vmem>>, vector<2x16x32xf32>,
    } else {
    }
    return
  }
  func.func @transform_0(%arg0: i32, %arg1: i32) -> (i32, i32, i32) {
    %c0_i32 = arith.constant 0 : i32
    %c0_i32_0 = arith.constant 0 : i32
    %c0_i32_1 = arith.constant 0 : i32
    return %arg0, %c0_i32, %c0_i32_0 : i32, i32, i32
  }
  func.func @transform_1(%arg0: i32, %arg1: i32) -> (i32, i32, i32) {
    %c0_i32 = arith.constant 0 : i32
    %c0_i32_0 = arith.constant 0 : i32
    %c0_i32_1 = arith.constant 0 : i32
    return %arg1, %c0_i32, %c0_i32_0 : i32, i32, i32
  }
  func.func @transform_2(%arg0: i32, %arg1: i32) -> (i32, i32, i32) {
    %c0_i32 = arith.constant 0 : i32
    %c0_i32_0 = arith.constant 0 : i32
    %c0_i32_1 = arith.constant 0 : i32
    return %arg1, %c0_i32, %c0_i32_0 : i32, i32, i32
  }
  func.func @transform_3(%arg0: i32, %arg1: i32) -> (i32, i32, i32) {
    %c0_i32 = arith.constant 0 : i32
    %c0_i32_0 = arith.constant 0 : i32
    %c0_i32_1 = arith.constant 0 : i32
    return %arg1, %c0_i32, %c0_i32_0 : i32, i32, i32
  }
  func.func @transform_4(%arg0: i32, %arg1: i32) -> (i32, i32, i32) {
    %c0_i32 = arith.constant 0 : i32
    %c0_i32_0 = arith.constant 0 : i32
    %c0_i32_1 = arith.constant 0 : i32
    return %arg1, %c0_i32, %c0_i32_0 : i32, i32, i32
  }
  func.func @transform_5(%arg0: i32, %arg1: i32) -> (i32, i32, i32) {
    %c0_i32 = arith.constant 0 : i32
    %c0_i32_0 = arith.constant 0 : i32
    %c0_i32_1 = arith.constant 0 : i32
    return %arg1, %c0_i32, %c0_i32_0 : i32, i32, i32
  }
  func.func @transform_6(%arg0: i32, %arg1: i32) -> (i32, i32, i32) {
    %c0_i32 = arith.constant 0 : i32
    %c0_i32_0 = arith.constant 0 : i32
    %c0_i32_1 = arith.constant 0 : i32
    return %arg1, %c0_i32, %c0_i32_0 : i32, i32, i32
  }
  func.func @transform_7(%arg0: i32, %arg1: i32) -> (i32, i32, i32) {
    %c0_i32 = arith.constant 0 : i32
    %c0_i32_0 = arith.constant 0 : i32
    %c0_i32_1 = arith.constant 0 : i32
    return %arg1, %c0_i32, %c0_i32_0 : i32, i32, i32
  }
  func.func @transform_8(%arg0: i32, %arg1: i32) -> (i32, i32, i32) {
    %c0_i32 = arith.constant 0 : i32
    %c0_i32_0 = arith.constant 0 : i32
    %c0_i32_1 = arith.constant 0 : i32
    return %arg1, %c0_i32, %c0_i32_0 : i32, i32, i32
  }
  func.func @transform_9(%arg0: i32, %arg1: i32) -> (i32, i32, i32) {
    %c0_i32 = arith.constant 0 : i32
    %c0_i32_0 = arith.constant 0 : i32
    %c0_i32_1 = arith.constant 0 : i32
    return %arg1, %c0_i32, %c0_i32_0 : i32, i32, i32
  }
  func.func @transform_10(%arg0: i32, %arg1: i32) -> (i32, i32, i32) {
    %c0_i32 = arith.constant 0 : i32
    %c0_i32_0 = arith.constant 0 : i32
    %c0_i32_1 = arith.constant 0 : i32
    return %arg1, %c0_i32, %c0_i32_0 : i32, i32, i32
  }
  func.func @transform_11(%arg0: i32, %arg1: i32) -> (i32, i32, i32) {
    %c0_i32 = arith.constant 0 : i32
    %c0_i32_0 = arith.constant 0 : i32
    %c0_i32_1 = arith.constant 0 : i32
    return %arg1, %c0_i32, %c0_i32_0 : i32, i32, i32
  }
  func.func @transform_12(%arg0: i32, %arg1: i32) -> (i32, i32, i32) {
    %c0_i32 = arith.constant 0 : i32
    %c0_i32_0 = arith.constant 0 : i32
    %c0_i32_1 = arith.constant 0 : i32
    return %arg0, %c0_i32, %c0_i32_0 : i32, i32, i32
  }
}

</mosaic_0001>

<llo_original>
// kernel: tpu_custom_call.1
$region0: #{tpu_custom_call.1}
  #allocation0 [shape = 'u32[]', space=smem, size = 0x4, offset = 0x4, fixed_abs, tag = 'smem constant byte address 0x4 - core index']
  #allocation1 [shape = 'u32[144,128]{1,0:T(1,128)}', space=vmem, size = 0x12000, scoped, tag = 'internal scratch']
  #allocation2 [shape = 'f32[2,16,32]{2,1,0:T(8,128)}', space=vmem, size = 0x4000, scoped, tag = 'scratch operand']
  #allocation3 [shape = 'bf16[2,16,32]{2,1,0:T(16,128)(2,1)}', space=vmem, size = 0x2000, scoped, tag = 'scratch operand']
  %s0 = inlined_call_operand.hbm [shape: f32[2,16,32], index: 0, kind: input, shape index: {}, may-alias: {0,12}]
  %s1 = inlined_call_operand.hbm [shape: f32[2,1,32], index: 1, kind: input, shape index: {}]
  %s2 = inlined_call_operand.hbm [shape: f32[2,1,32], index: 2, kind: input, shape index: {}]
  %s3 = inlined_call_operand.hbm [shape: bf16[2,32,96], index: 3, kind: input, shape index: {}]
  %s4 = inlined_call_operand.hbm [shape: bf16[2,32,32], index: 4, kind: input, shape index: {}]
  %s5 = inlined_call_operand.hbm [shape: f32[2,1,32], index: 5, kind: input, shape index: {}]
  %s6 = inlined_call_operand.hbm [shape: f32[2,1,32], index: 6, kind: input, shape index: {}]
  %s7 = inlined_call_operand.hbm [shape: f32[2,1,32], index: 7, kind: input, shape index: {}]
  %s8 = inlined_call_operand.hbm [shape: bf16[2,32,128], index: 8, kind: input, shape index: {}]
  %s9 = inlined_call_operand.hbm [shape: f32[2,1,128], index: 9, kind: input, shape index: {}]
  %s10 = inlined_call_operand.hbm [shape: bf16[2,128,32], index: 10, kind: input, shape index: {}]
  %s11 = inlined_call_operand.hbm [shape: f32[2,1,32], index: 11, kind: input, shape index: {}]
  %s12 = inlined_call_operand.hbm [shape: f32[2,16,32], index: 12, kind: output, shape index: {}, may-alias: {0,12}]
  %s13 = sld [smem:[#allocation0]]
  $region137: #{tpu_custom_call.1} parent=0
    _
  %s15 = ssub.s32 1, %s13
  %s16 = scalar_select 0, %s15, %s13
  $region1: #{tpu_custom_call.1} parent=0
    #allocation4 [shape = 'u8[16384]{0}', space=vmem, size = 0x4000, scoped, tag = 'input window, operand 0, single buffered']
    #allocation5 [shape = 's32[2]{0}', space=sflag, size = 0x8, scoped, tag = 'scoped memory for tpu_custom_call.1']
    #allocation6 [shape = 's32[2]{0}', space=sflag, size = 0x8, scoped, tag = 'scoped memory for tpu_custom_call.1']
    #allocation7 [shape = 'u8[1024]{0}', space=vmem, size = 0x400, scoped, tag = 'input window, operand 1']
    #allocation8 [shape = 's32[2]{0}', space=sflag, size = 0x8, scoped, tag = 'scoped memory for tpu_custom_call.1']
    #allocation9 [shape = 'u8[1024]{0}', space=vmem, size = 0x400, scoped, tag = 'input window, operand 2']
    #allocation10 [shape = 'u8[16384]{0}', space=vmem, size = 0x4000, scoped, tag = 'input window, operand 3']
    #allocation11 [shape = 's32[2]{0}', space=sflag, size = 0x8, scoped, tag = 'scoped memory for tpu_custom_call.1']
    #allocation12 [shape = 'u8[16384]{0}', space=vmem, size = 0x4000, scoped, tag = 'input window, operand 4']
    #allocation13 [shape = 'u8[1024]{0}', space=vmem, size = 0x400, scoped, tag = 'input window, operand 5']
    #allocation14 [shape = 's32[2]{0}', space=sflag, size = 0x8, scoped, tag = 'scoped memory for tpu_custom_call.1']
    #allocation15 [shape = 'u8[1024]{0}', space=vmem, size = 0x400, scoped, tag = 'input window, operand 6']
    #allocation16 [shape = 'u8[1024]{0}', space=vmem, size = 0x400, scoped, tag = 'input window, operand 7']
    #allocation17 [shape = 's32[2]{0}', space=sflag, size = 0x8, scoped, tag = 'scoped memory for tpu_custom_call.1']
    #allocation18 [shape = 'u8[16384]{0}', space=vmem, size = 0x4000, scoped, tag = 'input window, operand 8']
    #allocation19 [shape = 'u8[1024]{0}', space=vmem, size = 0x400, scoped, tag = 'input window, operand 9']
    #allocation20 [shape = 's32[2]{0}', space=sflag, size = 0x8, scoped, tag = 'scoped memory for tpu_custom_call.1']
    #allocation21 [shape = 'u8[65536]{0}', space=vmem, size = 0x10000, scoped, tag = 'input window, operand 10']
    #allocation22 [shape = 'u8[1024]{0}', space=vmem, size = 0x400, scoped, tag = 'input window, operand 11']
    #allocation23 [shape = 's32[2]{0}', space=sflag, size = 0x8, scoped, tag = 'scoped memory for tpu_custom_call.1']
    #allocation24 [shape = 'u8[16384]{0}', space=vmem, size = 0x4000, scoped, tag = 'output window, operand 0, single buffered']
    %17 = vsyncpa [#allocation5], 0
    %18 = vsyncpa [#allocation8], 0
    %s19 = scalar_lea.sflag [#allocation8], 1
    %20 = vsyncpa %s19, 0
    %21 = vsyncpa [#allocation11], 0
    %s22 = scalar_lea.sflag [#allocation11], 1
    %23 = vsyncpa %s22, 0
    %24 = vsyncpa [#allocation14], 0
    %s25 = scalar_lea.sflag [#allocation14], 1
    %26 = vsyncpa %s25, 0
    %27 = vsyncpa [#allocation17], 0
    %s28 = scalar_lea.sflag [#allocation17], 1
    %29 = vsyncpa %s28, 0
    %30 = vsyncpa [#allocation20], 0
    %s31 = scalar_lea.sflag [#allocation20], 1
    %32 = vsyncpa %s31, 0
    %33 = vsyncpa [#allocation23], 0
    %s34 = scalar_lea.sflag [#allocation23], 1
    %35 = vsyncpa %s34, 0
    %36 = vsyncpa [#allocation6], 0
    loop: start=0, step=1, limit=4
    $region2: #{tpu_custom_call.1} parent=1 // loop_pre_header
      _
    $region3: #{tpu_custom_call.1} parent=1 // loop_header
      %s38 = sphi 0, %s42
      %p39 = scmp.ge.s32.totalorder %s38, 4
      %s45 = sphi 0, %s57
      %s46 = sphi 0, %s53
      %s47 = sphi 0, %s45
      %s48 = sphi 0, %s46
      %s49 = sphi 0, %s47
      %s50 = sphi 0, %s48
      %s60 = sphi 0, %s62
      %s63 = sphi 0, %s60
      %s64 = sphi 0, %s63
      %s80 = sphi 0, %s64
      %s86 = sphi 0, %s88
      %s89 = sphi 0, %s86
      %s90 = sphi 0, %s89
      %s106 = sphi 0, %s90
      %s112 = sphi 0, %s114
      %s115 = sphi 0, %s112
      %s116 = sphi 0, %s115
      %s132 = sphi 0, %s116
      %s138 = sphi 0, %s140
      %s141 = sphi 0, %s138
      %s142 = sphi 0, %s141
      %s158 = sphi 0, %s142
      %s164 = sphi 0, %s166
      %s167 = sphi 0, %s164
      %s168 = sphi 0, %s167
      %s184 = sphi 0, %s168
      %s190 = sphi 0, %s192
      %s193 = sphi 0, %s190
      %s194 = sphi 0, %s193
      %s210 = sphi 0, %s194
      %s216 = sphi 0, %s218
      %s219 = sphi 0, %s216
      %s220 = sphi 0, %s219
      %s236 = sphi 0, %s220
      %s242 = sphi 0, %s244
      %s245 = sphi 0, %s242
      %s246 = sphi 0, %s245
      %s262 = sphi 0, %s246
      %s268 = sphi 0, %s270
      %s271 = sphi 0, %s268
      %s272 = sphi 0, %s271
      %s288 = sphi 0, %s272
      %s294 = sphi 0, %s296
      %s297 = sphi 0, %s294
      %s298 = sphi 0, %s297
      %s314 = sphi 0, %s298
      %s320 = sphi 0, %s322
      %s323 = sphi 0, %s320
      %s324 = sphi 0, %s323
      %s340 = sphi 0, %s324
      %s346 = sphi 0, %s348
      %s349 = sphi 0, %s346
      %s350 = sphi 0, %s349
      %s366 = sphi 0, %s350
      %s372 = sphi 0, %s374
      %s375 = sphi 0, %s372
      %s376 = sphi 0, %s375
      %s392 = sphi 0, %s376
    $region4: #{tpu_custom_call.1} parent=1 // loop_header_branch
      %41 = sbr.rel (%p39) target = $region8
    $region5: #{tpu_custom_call.1} parent=1 // loop_body
      %s43 = ssub.s32 %s38, 1
      %s44 = ssub.s32 %s38, 2
      %s51 = sadd.s32 1, %s46
      %p52 = scmp.ge.s32.totalorder %s51, 2
      %s53 = scalar_select %p52, 0, %s51
      %s54 = sadd.s32 1, %s45
      %s55 = scalar_select %p52, %s54, %s45
      %p56 = scmp.ge.s32.totalorder %s55, 1
      %s57 = scalar_select %p56, 0, %s55
      %s58 = ssub.s32 %s45, %s57
      %p59 = scmp.eq.s32.totalorder %s58, 0
      %s61 = sadd.s32 %s60, 1
      %s62 = scalar_select %p59, %s60, %s61
      %p65 = pneg %p59
      %p66 = scmp.eq.s32.totalorder %s38, 1
      %p67 = por %p65, %p66
      %p68 = scmp.ne.s32.totalorder %s60, %s63
      %p69 = scmp.eq.s32.totalorder %s38, 0
      %p70 = por %p68, %p69
      %p71 = scmp.ne.s32.totalorder %s60, %s63
      %p72 = scmp.eq.s32.totalorder %s43, 1
      %p73 = por %p71, %p72
      %p74 = scmp.ne.s32.totalorder %s63, %s64
      %p75 = scmp.eq.s32.totalorder %s43, 0
      %p76 = por %p74, %p75
      %p77 = scmp.ne.s32.totalorder %s63, %s64
      %p78 = scmp.eq.s32.totalorder %s44, 1
      %p79 = por %p77, %p78
      %p81 = scmp.ne.s32.totalorder %s64, %s80
      %p82 = scmp.eq.s32.totalorder %s44, 0
      %p83 = por %p81, %p82
      %s84 = ssub.s32 %s46, %s53
      %p85 = scmp.eq.s32.totalorder %s84, 0
      %s87 = sadd.s32 %s86, 1
      %s88 = scalar_select %p85, %s86, %s87
      %p91 = pneg %p85
      %p92 = scmp.eq.s32.totalorder %s38, 1
      %p93 = por %p91, %p92
      %p94 = scmp.ne.s32.totalorder %s86, %s89
      %p95 = scmp.eq.s32.totalorder %s38, 0
      %p96 = por %p94, %p95
      %p97 = scmp.ne.s32.totalorder %s86, %s89
      %p98 = scmp.eq.s32.totalorder %s43, 1
      %p99 = por %p97, %p98
      %p100 = scmp.ne.s32.totalorder %s89, %s90
      %p101 = scmp.eq.s32.totalorder %s43, 0
      %p102 = por %p100, %p101
      %p103 = scmp.ne.s32.totalorder %s89, %s90
      %p104 = scmp.eq.s32.totalorder %s44, 1
      %p105 = por %p103, %p104
      %p107 = scmp.ne.s32.totalorder %s90, %s106
      %p108 = scmp.eq.s32.totalorder %s44, 0
      %p109 = por %p107, %p108
      %s110 = ssub.s32 %s46, %s53
      %p111 = scmp.eq.s32.totalorder %s110, 0
      %s113 = sadd.s32 %s112, 1
      %s114 = scalar_select %p111, %s112, %s113
      %p117 = pneg %p111
      %p118 = scmp.eq.s32.totalorder %s38, 1
      %p119 = por %p117, %p118
      %p120 = scmp.ne.s32.totalorder %s112, %s115
      %p121 = scmp.eq.s32.totalorder %s38, 0
      %p122 = por %p120, %p121
      %p123 = scmp.ne.s32.totalorder %s112, %s115
      %p124 = scmp.eq.s32.totalorder %s43, 1
      %p125 = por %p123, %p124
      %p126 = scmp.ne.s32.totalorder %s115, %s116
      %p127 = scmp.eq.s32.totalorder %s43, 0
      %p128 = por %p126, %p127
      %p129 = scmp.ne.s32.totalorder %s115, %s116
      %p130 = scmp.eq.s32.totalorder %s44, 1
      %p131 = por %p129, %p130
      %p133 = scmp.ne.s32.totalorder %s116, %s132
      %p134 = scmp.eq.s32.totalorder %s44, 0
      %p135 = por %p133, %p134
      %s136 = ssub.s32 %s46, %s53
      %p137 = scmp.eq.s32.totalorder %s136, 0
      %s139 = sadd.s32 %s138, 1
      %s140 = scalar_select %p137, %s138, %s139
      %p143 = pneg %p137
      %p144 = scmp.eq.s32.totalorder %s38, 1
      %p145 = por %p143, %p144
      %p146 = scmp.ne.s32.totalorder %s138, %s141
      %p147 = scmp.eq.s32.totalorder %s38, 0
      %p148 = por %p146, %p147
      %p149 = scmp.ne.s32.totalorder %s138, %s141
      %p150 = scmp.eq.s32.totalorder %s43, 1
      %p151 = por %p149, %p150
      %p152 = scmp.ne.s32.totalorder %s141, %s142
      %p153 = scmp.eq.s32.totalorder %s43, 0
      %p154 = por %p152, %p153
      %p155 = scmp.ne.s32.totalorder %s141, %s142
      %p156 = scmp.eq.s32.totalorder %s44, 1
      %p157 = por %p155, %p156
      %p159 = scmp.ne.s32.totalorder %s142, %s158
      %p160 = scmp.eq.s32.totalorder %s44, 0
      %p161 = por %p159, %p160
      %s162 = ssub.s32 %s46, %s53
      %p163 = scmp.eq.s32.totalorder %s162, 0
      %s165 = sadd.s32 %s164, 1
      %s166 = scalar_select %p163, %s164, %s165
      %p169 = pneg %p163
      %p170 = scmp.eq.s32.totalorder %s38, 1
      %p171 = por %p169, %p170
      %p172 = scmp.ne.s32.totalorder %s164, %s167
      %p173 = scmp.eq.s32.totalorder %s38, 0
      %p174 = por %p172, %p173
      %p175 = scmp.ne.s32.totalorder %s164, %s167
      %p176 = scmp.eq.s32.totalorder %s43, 1
      %p177 = por %p175, %p176
      %p178 = scmp.ne.s32.totalorder %s167, %s168
      %p179 = scmp.eq.s32.totalorder %s43, 0
      %p180 = por %p178, %p179
      %p181 = scmp.ne.s32.totalorder %s167, %s168
      %p182 = scmp.eq.s32.totalorder %s44, 1
      %p183 = por %p181, %p182
      %p185 = scmp.ne.s32.totalorder %s168, %s184
      %p186 = scmp.eq.s32.totalorder %s44, 0
      %p187 = por %p185, %p186
      %s188 = ssub.s32 %s46, %s53
      %p189 = scmp.eq.s32.totalorder %s188, 0
      %s191 = sadd.s32 %s190, 1
      %s192 = scalar_select %p189, %s190, %s191
      %p195 = pneg %p189
      %p196 = scmp.eq.s32.totalorder %s38, 1
      %p197 = por %p195, %p196
      %p198 = scmp.ne.s32.totalorder %s190, %s193
      %p199 = scmp.eq.s32.totalorder %s38, 0
      %p200 = por %p198, %p199
      %p201 = scmp.ne.s32.totalorder %s190, %s193
      %p202 = scmp.eq.s32.totalorder %s43, 1
      %p203 = por %p201, %p202
      %p204 = scmp.ne.s32.totalorder %s193, %s194
      %p205 = scmp.eq.s32.totalorder %s43, 0
      %p206 = por %p204, %p205
      %p207 = scmp.ne.s32.totalorder %s193, %s194
      %p208 = scmp.eq.s32.totalorder %s44, 1
      %p209 = por %p207, %p208
      %p211 = scmp.ne.s32.totalorder %s194, %s210
      %p212 = scmp.eq.s32.totalorder %s44, 0
      %p213 = por %p211, %p212
      %s214 = ssub.s32 %s46, %s53
      %p215 = scmp.eq.s32.totalorder %s214, 0
      %s217 = sadd.s32 %s216, 1
      %s218 = scalar_select %p215, %s216, %s217
      %p221 = pneg %p215
      %p222 = scmp.eq.s32.totalorder %s38, 1
      %p223 = por %p221, %p222
      %p224 = scmp.ne.s32.totalorder %s216, %s219
      %p225 = scmp.eq.s32.totalorder %s38, 0
      %p226 = por %p224, %p225
      %p227 = scmp.ne.s32.totalorder %s216, %s219
      %p228 = scmp.eq.s32.totalorder %s43, 1
      %p229 = por %p227, %p228
      %p230 = scmp.ne.s32.totalorder %s219, %s220
      %p231 = scmp.eq.s32.totalorder %s43, 0
      %p232 = por %p230, %p231
      %p233 = scmp.ne.s32.totalorder %s219, %s220
      %p234 = scmp.eq.s32.totalorder %s44, 1
      %p235 = por %p233, %p234
      %p237 = scmp.ne.s32.totalorder %s220, %s236
      %p238 = scmp.eq.s32.totalorder %s44, 0
      %p239 = por %p237, %p238
      %s240 = ssub.s32 %s46, %s53
      %p241 = scmp.eq.s32.totalorder %s240, 0
      %s243 = sadd.s32 %s242, 1
      %s244 = scalar_select %p241, %s242, %s243
      %p247 = pneg %p241
      %p248 = scmp.eq.s32.totalorder %s38, 1
      %p249 = por %p247, %p248
      %p250 = scmp.ne.s32.totalorder %s242, %s245
      %p251 = scmp.eq.s32.totalorder %s38, 0
      %p252 = por %p250, %p251
      %p253 = scmp.ne.s32.totalorder %s242, %s245
      %p254 = scmp.eq.s32.totalorder %s43, 1
      %p255 = por %p253, %p254
      %p256 = scmp.ne.s32.totalorder %s245, %s246
      %p257 = scmp.eq.s32.totalorder %s43, 0
      %p258 = por %p256, %p257
      %p259 = scmp.ne.s32.totalorder %s245, %s246
      %p260 = scmp.eq.s32.totalorder %s44, 1
      %p261 = por %p259, %p260
      %p263 = scmp.ne.s32.totalorder %s246, %s262
      %p264 = scmp.eq.s32.totalorder %s44, 0
      %p265 = por %p263, %p264
      %s266 = ssub.s32 %s46, %s53
      %p267 = scmp.eq.s32.totalorder %s266, 0
      %s269 = sadd.s32 %s268, 1
      %s270 = scalar_select %p267, %s268, %s269
      %p273 = pneg %p267
      %p274 = scmp.eq.s32.totalorder %s38, 1
      %p275 = por %p273, %p274
      %p276 = scmp.ne.s32.totalorder %s268, %s271
      %p277 = scmp.eq.s32.totalorder %s38, 0
      %p278 = por %p276, %p277
      %p279 = scmp.ne.s32.totalorder %s268, %s271
      %p280 = scmp.eq.s32.totalorder %s43, 1
      %p281 = por %p279, %p280
      %p282 = scmp.ne.s32.totalorder %s271, %s272
      %p283 = scmp.eq.s32.totalorder %s43, 0
      %p284 = por %p282, %p283
      %p285 = scmp.ne.s32.totalorder %s271, %s272
      %p286 = scmp.eq.s32.totalorder %s44, 1
      %p287 = por %p285, %p286
      %p289 = scmp.ne.s32.totalorder %s272, %s288
      %p290 = scmp.eq.s32.totalorder %s44, 0
      %p291 = por %p289, %p290
      %s292 = ssub.s32 %s46, %s53
      %p293 = scmp.eq.s32.totalorder %s292, 0
      %s295 = sadd.s32 %s294, 1
      %s296 = scalar_select %p293, %s294, %s295
      %p299 = pneg %p293
      %p300 = scmp.eq.s32.totalorder %s38, 1
      %p301 = por %p299, %p300
      %p302 = scmp.ne.s32.totalorder %s294, %s297
      %p303 = scmp.eq.s32.totalorder %s38, 0
      %p304 = por %p302, %p303
      %p305 = scmp.ne.s32.totalorder %s294, %s297
      %p306 = scmp.eq.s32.totalorder %s43, 1
      %p307 = por %p305, %p306
      %p308 = scmp.ne.s32.totalorder %s297, %s298
      %p309 = scmp.eq.s32.totalorder %s43, 0
      %p310 = por %p308, %p309
      %p311 = scmp.ne.s32.totalorder %s297, %s298
      %p312 = scmp.eq.s32.totalorder %s44, 1
      %p313 = por %p311, %p312
      %p315 = scmp.ne.s32.totalorder %s298, %s314
      %p316 = scmp.eq.s32.totalorder %s44, 0
      %p317 = por %p315, %p316
      %s318 = ssub.s32 %s46, %s53
      %p319 = scmp.eq.s32.totalorder %s318, 0
      %s321 = sadd.s32 %s320, 1
      %s322 = scalar_select %p319, %s320, %s321
      %p325 = pneg %p319
      %p326 = scmp.eq.s32.totalorder %s38, 1
      %p327 = por %p325, %p326
      %p328 = scmp.ne.s32.totalorder %s320, %s323
      %p329 = scmp.eq.s32.totalorder %s38, 0
      %p330 = por %p328, %p329
      %p331 = scmp.ne.s32.totalorder %s320, %s323
      %p332 = scmp.eq.s32.totalorder %s43, 1
      %p333 = por %p331, %p332
      %p334 = scmp.ne.s32.totalorder %s323, %s324
      %p335 = scmp.eq.s32.totalorder %s43, 0
      %p336 = por %p334, %p335
      %p337 = scmp.ne.s32.totalorder %s323, %s324
      %p338 = scmp.eq.s32.totalorder %s44, 1
      %p339 = por %p337, %p338
      %p341 = scmp.ne.s32.totalorder %s324, %s340
      %p342 = scmp.eq.s32.totalorder %s44, 0
      %p343 = por %p341, %p342
      %s344 = ssub.s32 %s46, %s53
      %p345 = scmp.eq.s32.totalorder %s344, 0
      %s347 = sadd.s32 %s346, 1
      %s348 = scalar_select %p345, %s346, %s347
      %p351 = pneg %p345
      %p352 = scmp.eq.s32.totalorder %s38, 1
      %p353 = por %p351, %p352
      %p354 = scmp.ne.s32.totalorder %s346, %s349
      %p355 = scmp.eq.s32.totalorder %s38, 0
      %p356 = por %p354, %p355
      %p357 = scmp.ne.s32.totalorder %s346, %s349
      %p358 = scmp.eq.s32.totalorder %s43, 1
      %p359 = por %p357, %p358
      %p360 = scmp.ne.s32.totalorder %s349, %s350
      %p361 = scmp.eq.s32.totalorder %s43, 0
      %p362 = por %p360, %p361
      %p363 = scmp.ne.s32.totalorder %s349, %s350
      %p364 = scmp.eq.s32.totalorder %s44, 1
      %p365 = por %p363, %p364
      %p367 = scmp.ne.s32.totalorder %s350, %s366
      %p368 = scmp.eq.s32.totalorder %s44, 0
      %p369 = por %p367, %p368
      %s370 = ssub.s32 %s45, %s57
      %p371 = scmp.eq.s32.totalorder %s370, 0
      %s373 = sadd.s32 %s372, 1
      %s374 = scalar_select %p371, %s372, %s373
      %p377 = pneg %p371
      %p378 = scmp.eq.s32.totalorder %s38, 1
      %p379 = por %p377, %p378
      %p380 = scmp.ne.s32.totalorder %s372, %s375
      %p381 = scmp.eq.s32.totalorder %s38, 0
      %p382 = por %p380, %p381
      %p383 = scmp.ne.s32.totalorder %s372, %s375
      %p384 = scmp.eq.s32.totalorder %s43, 1
      %p385 = por %p383, %p384
      %p386 = scmp.ne.s32.totalorder %s375, %s376
      %p387 = scmp.eq.s32.totalorder %s43, 0
      %p388 = por %p386, %p387
      %p389 = scmp.ne.s32.totalorder %s375, %s376
      %p390 = scmp.eq.s32.totalorder %s44, 1
      %p391 = por %p389, %p390
      %p393 = scmp.ne.s32.totalorder %s376, %s392
      %p394 = scmp.eq.s32.totalorder %s44, 0
      %p395 = por %p393, %p394
      %p396 = scmp.le.s32.totalorder 1, %s38
      %p397 = scmp.lt.s32.totalorder %s38, 3
      %p398 = pnand %p396, %p397
      %p399 = pneg %p398
      // Predicated region
      $region9: #{tpu_custom_call.1} parent=5 // pred_check
        _
      $region10: #{tpu_custom_call.1} parent=5 // pred_check_branch
        %401 = sbr.rel (%p398) target = $region12
      $region11: #{tpu_custom_call.1} parent=5 // pred_region
        %s402 = ssub.s32 %s38, 1
        // Predicated region
        $region13: #{tpu_custom_call.1} parent=11 // pred_check
          %p403 = pneg %p76
        $region14: #{tpu_custom_call.1} parent=11 // pred_check_branch
          %405 = sbr.rel (%p403) target = $region16
        $region15: #{tpu_custom_call.1} parent=11 // pred_region
          %s406 = smul.u32 2, %s47
          %s408 = ssub.s32 512, 512
          %409 = vsyncadd [#allocation5], %s408
          %s410 = smul.addr %s406, 2
          %s411 = smul.addr %s410, 128
          %s412 = scalar_lea.hbm %s0, %s411
          %s413 = sshll.u32 [#allocation4], 4
          %s414 = int_to_ptr.vmem [resolvable:$true] %s413
          %419 = dma.hbm_to_vmem [thread:$0]  %s412, 512, %s414, [#allocation5], 128, 128, 8
        $region16: #{tpu_custom_call.1} parent=11 // pred_fallthru
          _
      $region12: #{tpu_custom_call.1} parent=5 // pred_fallthru
        _
      %p420 = scmp.lt.s32.totalorder %s38, 2
      // Predicated region
      $region17: #{tpu_custom_call.1} parent=5 // pred_check
        %p421 = pneg %p420
      $region18: #{tpu_custom_call.1} parent=5 // pred_check_branch
        %423 = sbr.rel (%p421) target = $region20
      $region19: #{tpu_custom_call.1} parent=5 // pred_region
        // Predicated region
        $region21: #{tpu_custom_call.1} parent=19 // pred_check
          %p424 = pneg %p96
        $region22: #{tpu_custom_call.1} parent=19 // pred_check_branch
          %426 = sbr.rel (%p424) target = $region24
        $region23: #{tpu_custom_call.1} parent=19 // pred_region
          %s427 = sand.u32 %s38, 1
          %s428 = scalar_lea.sflag [#allocation8], %s427
          %s429 = sand.u32 %s86, 1
          %s430 = scalar_lea.vmem [#allocation7], %s429
          %s432 = ssub.s32 16, 16
          %433 = vsyncadd %s428, %s432
          %s434 = smul.addr %s46, 16
          %s435 = scalar_lea.hbm %s1, %s434
          %s437 = sshll.u32 %s430, 4
          %s438 = int_to_ptr.vmem [resolvable:$true] %s437
          %440 = dma.hbm_to_vmem [thread:$0]  %s435, 16, %s438, %s428
        $region24: #{tpu_custom_call.1} parent=19 // pred_fallthru
          _
        // Predicated region
        $region25: #{tpu_custom_call.1} parent=19 // pred_check
          %p441 = pneg %p122
        $region26: #{tpu_custom_call.1} parent=19 // pred_check_branch
          %443 = sbr.rel (%p441) target = $region28
        $region27: #{tpu_custom_call.1} parent=19 // pred_region
          %s444 = sand.u32 %s38, 1
          %s445 = scalar_lea.sflag [#allocation8], %s444
          %s446 = sand.u32 %s112, 1
          %s447 = scalar_lea.vmem [#allocation9], %s446
          %s449 = ssub.s32 16, 16
          %450 = vsyncadd %s445, %s449
          %s451 = smul.addr %s46, 16
          %s452 = scalar_lea.hbm %s2, %s451
          %s454 = sshll.u32 %s447, 4
          %s455 = int_to_ptr.vmem [resolvable:$true] %s454
          %457 = dma.hbm_to_vmem [thread:$0]  %s452, 16, %s455, %s445
        $region28: #{tpu_custom_call.1} parent=19 // pred_fallthru
          _
        // Predicated region
        $region29: #{tpu_custom_call.1} parent=19 // pred_check
          %p458 = pneg %p148
        $region30: #{tpu_custom_call.1} parent=19 // pred_check_branch
          %460 = sbr.rel (%p458) target = $region32
        $region31: #{tpu_custom_call.1} parent=19 // pred_region
          %s461 = sand.u32 %s38, 1
          %s462 = scalar_lea.sflag [#allocation11], %s461
          %s463 = sand.u32 %s138, 1
          %s464 = smul.addr %s463, 16
          %s465 = scalar_lea.vmem [#allocation10], %s464
          %s467 = ssub.s32 256, 256
          %468 = vsyncadd %s462, %s467
          %s469 = smul.addr %s46, 4
          %s470 = smul.addr %s469, 64
          %s471 = scalar_lea.hbm %s3, %s470
          %s472 = sshll.u32 %s465, 4
          %s473 = int_to_ptr.vmem [resolvable:$true] %s472
          %478 = dma.hbm_to_vmem [thread:$0]  %s471, 256, %s473, %s462, 64, 64, 4
        $region32: #{tpu_custom_call.1} parent=19 // pred_fallthru
          _
        // Predicated region
        $region33: #{tpu_custom_call.1} parent=19 // pred_check
          %p479 = pneg %p174
        $region34: #{tpu_custom_call.1} parent=19 // pred_check_branch
          %481 = sbr.rel (%p479) target = $region36
        $region35: #{tpu_custom_call.1} parent=19 // pred_region
          %s482 = sand.u32 %s38, 1
          %s483 = scalar_lea.sflag [#allocation11], %s482
          %s484 = sand.u32 %s164, 1
          %s485 = smul.addr %s484, 16
          %s486 = scalar_lea.vmem [#allocation12], %s485
          %s488 = ssub.s32 256, 256
          %489 = vsyncadd %s483, %s488
          %s490 = smul.addr %s46, 4
          %s491 = smul.addr %s490, 64
          %s492 = scalar_lea.hbm %s4, %s491
          %s493 = sshll.u32 %s486, 4
          %s494 = int_to_ptr.vmem [resolvable:$true] %s493
          %499 = dma.hbm_to_vmem [thread:$0]  %s492, 256, %s494, %s483, 64, 64, 4
        $region36: #{tpu_custom_call.1} parent=19 // pred_fallthru
          _
        // Predicated region
        $region37: #{tpu_custom_call.1} parent=19 // pred_check
          %p500 = pneg %p200
        $region38: #{tpu_custom_call.1} parent=19 // pred_check_branch
          %502 = sbr.rel (%p500) target = $region40
        $region39: #{tpu_custom_call.1} parent=19 // pred_region
          %s503 = sand.u32 %s38, 1
          %s504 = scalar_lea.sflag [#allocation14], %s503
          %s505 = sand.u32 %s190, 1
          %s506 = scalar_lea.vmem [#allocation13], %s505
          %s508 = ssub.s32 16, 16
          %509 = vsyncadd %s504, %s508
          %s510 = smul.addr %s46, 16
          %s511 = scalar_lea.hbm %s5, %s510
          %s513 = sshll.u32 %s506, 4
          %s514 = int_to_ptr.vmem [resolvable:$true] %s513
          %516 = dma.hbm_to_vmem [thread:$0]  %s511, 16, %s514, %s504
        $region40: #{tpu_custom_call.1} parent=19 // pred_fallthru
          _
        // Predicated region
        $region41: #{tpu_custom_call.1} parent=19 // pred_check
          %p517 = pneg %p226
        $region42: #{tpu_custom_call.1} parent=19 // pred_check_branch
          %519 = sbr.rel (%p517) target = $region44
        $region43: #{tpu_custom_call.1} parent=19 // pred_region
          %s520 = sand.u32 %s38, 1
          %s521 = scalar_lea.sflag [#allocation14], %s520
          %s522 = sand.u32 %s216, 1
          %s523 = scalar_lea.vmem [#allocation15], %s522
          %s525 = ssub.s32 16, 16
          %526 = vsyncadd %s521, %s525
          %s527 = smul.addr %s46, 16
          %s528 = scalar_lea.hbm %s6, %s527
          %s530 = sshll.u32 %s523, 4
          %s531 = int_to_ptr.vmem [resolvable:$true] %s530
          %533 = dma.hbm_to_vmem [thread:$0]  %s528, 16, %s531, %s521
        $region44: #{tpu_custom_call.1} parent=19 // pred_fallthru
          _
        // Predicated region
        $region45: #{tpu_custom_call.1} parent=19 // pred_check
          %p534 = pneg %p252
        $region46: #{tpu_custom_call.1} parent=19 // pred_check_branch
          %536 = sbr.rel (%p534) target = $region48
        $region47: #{tpu_custom_call.1} parent=19 // pred_region
          %s537 = sand.u32 %s38, 1
          %s538 = scalar_lea.sflag [#allocation17], %s537
          %s539 = sand.u32 %s242, 1
          %s540 = scalar_lea.vmem [#allocation16], %s539
          %s542 = ssub.s32 16, 16
          %543 = vsyncadd %s538, %s542
          %s544 = smul.addr %s46, 16
          %s545 = scalar_lea.hbm %s7, %s544
          %s547 = sshll.u32 %s540, 4
          %s548 = int_to_ptr.vmem [resolvable:$true] %s547
          %550 = dma.hbm_to_vmem [thread:$0]  %s545, 16, %s548, %s538
        $region48: #{tpu_custom_call.1} parent=19 // pred_fallthru
          _
        // Predicated region
        $region49: #{tpu_custom_call.1} parent=19 // pred_check
          %p551 = pneg %p278
        $region50: #{tpu_custom_call.1} parent=19 // pred_check_branch
          %553 = sbr.rel (%p551) target = $region52
        $region51: #{tpu_custom_call.1} parent=19 // pred_region
          %s554 = sand.u32 %s38, 1
          %s555 = scalar_lea.sflag [#allocation17], %s554
          %s556 = sand.u32 %s268, 1
          %s557 = smul.addr %s556, 16
          %s558 = scalar_lea.vmem [#allocation18], %s557
          %s560 = ssub.s32 256, 256
          %561 = vsyncadd %s555, %s560
          %s562 = smul.addr %s46, 4
          %s563 = smul.addr %s562, 64
          %s564 = scalar_lea.hbm %s8, %s563
          %s565 = sshll.u32 %s558, 4
          %s566 = int_to_ptr.vmem [resolvable:$true] %s565
          %571 = dma.hbm_to_vmem [thread:$0]  %s564, 256, %s566, %s555, 64, 64, 4
        $region52: #{tpu_custom_call.1} parent=19 // pred_fallthru
          _
        // Predicated region
        $region53: #{tpu_custom_call.1} parent=19 // pred_check
          %p572 = pneg %p304
        $region54: #{tpu_custom_call.1} parent=19 // pred_check_branch
          %574 = sbr.rel (%p572) target = $region56
        $region55: #{tpu_custom_call.1} parent=19 // pred_region
          %s575 = sand.u32 %s38, 1
          %s576 = scalar_lea.sflag [#allocation20], %s575
          %s577 = sand.u32 %s294, 1
          %s578 = scalar_lea.vmem [#allocation19], %s577
          %s580 = ssub.s32 16, 16
          %581 = vsyncadd %s576, %s580
          %s582 = smul.addr %s46, 16
          %s583 = scalar_lea.hbm %s9, %s582
          %s585 = sshll.u32 %s578, 4
          %s586 = int_to_ptr.vmem [resolvable:$true] %s585
          %588 = dma.hbm_to_vmem [thread:$0]  %s583, 16, %s586, %s576
        $region56: #{tpu_custom_call.1} parent=19 // pred_fallthru
          _
        // Predicated region
        $region57: #{tpu_custom_call.1} parent=19 // pred_check
          %p589 = pneg %p330
        $region58: #{tpu_custom_call.1} parent=19 // pred_check_branch
          %591 = sbr.rel (%p589) target = $region60
        $region59: #{tpu_custom_call.1} parent=19 // pred_region
          %s592 = sand.u32 %s38, 1
          %s593 = scalar_lea.sflag [#allocation20], %s592
          %s594 = sand.u32 %s320, 1
          %s595 = smul.addr %s594, 64
          %s596 = scalar_lea.vmem [#allocation21], %s595
          %s598 = ssub.s32 1024, 1024
          %599 = vsyncadd %s593, %s598
          %s600 = smul.addr %s46, 16
          %s601 = smul.addr %s600, 64
          %s602 = scalar_lea.hbm %s10, %s601
          %s603 = sshll.u32 %s596, 4
          %s604 = int_to_ptr.vmem [resolvable:$true] %s603
          %609 = dma.hbm_to_vmem [thread:$0]  %s602, 1024, %s604, %s593, 64, 64, 4
        $region60: #{tpu_custom_call.1} parent=19 // pred_fallthru
          _
        // Predicated region
        $region61: #{tpu_custom_call.1} parent=19 // pred_check
          %p610 = pneg %p356
        $region62: #{tpu_custom_call.1} parent=19 // pred_check_branch
          %612 = sbr.rel (%p610) target = $region64
        $region63: #{tpu_custom_call.1} parent=19 // pred_region
          %s613 = sand.u32 %s346, 1
          %s614 = scalar_lea.sflag [#allocation23], %s613
          %s615 = sand.u32 %s346, 1
          %s616 = scalar_lea.vmem [#allocation22], %s615
          %s618 = ssub.s32 16, 16
          %619 = vsyncadd %s614, %s618
          %s620 = smul.addr %s46, 16
          %s621 = scalar_lea.hbm %s11, %s620
          %s623 = sshll.u32 %s616, 4
          %s624 = int_to_ptr.vmem [resolvable:$true] %s623
          %626 = dma.hbm_to_vmem [thread:$0]  %s621, 16, %s624, %s614
        $region64: #{tpu_custom_call.1} parent=19 // pred_fallthru
          _
      $region20: #{tpu_custom_call.1} parent=5 // pred_fallthru
        _
      %p627 = scmp.le.s32.totalorder 1, %s38
      %p628 = scmp.lt.s32.totalorder %s38, 3
      %p629 = pnand %p627, %p628
      %p630 = pneg %p629
      // Predicated region
      $region65: #{tpu_custom_call.1} parent=5 // pred_check
        _
      $region66: #{tpu_custom_call.1} parent=5 // pred_check_branch
        %632 = sbr.rel (%p629) target = $region68
      $region67: #{tpu_custom_call.1} parent=5 // pred_region
        %s633 = ssub.s32 %s38, 1
        // Predicated region
        $region69: #{tpu_custom_call.1} parent=67 // pred_check
          %p634 = pneg %p76
        $region70: #{tpu_custom_call.1} parent=67 // pred_check_branch
          %636 = sbr.rel (%p634) target = $region72
        $region71: #{tpu_custom_call.1} parent=67 // pred_region
          %637 = dma.done [#allocation5], 512
        $region72: #{tpu_custom_call.1} parent=67 // pred_fallthru
          _
        %s638 = sand.u32 %s43, 1
        %s639 = scalar_lea.sflag [#allocation8], %s638
        %s640 = sand.u32 %s89, 1
        %s641 = scalar_lea.vmem [#allocation7], %s640
        // Predicated region
        $region73: #{tpu_custom_call.1} parent=67 // pred_check
          %p642 = pneg %p102
        $region74: #{tpu_custom_call.1} parent=67 // pred_check_branch
          %644 = sbr.rel (%p642) target = $region76
        $region75: #{tpu_custom_call.1} parent=67 // pred_region
          %645 = dma.done %s639, 16
        $region76: #{tpu_custom_call.1} parent=67 // pred_fallthru
          _
        %s646 = sand.u32 %s43, 1
        %s647 = scalar_lea.sflag [#allocation8], %s646
        %s648 = sand.u32 %s115, 1
        %s649 = scalar_lea.vmem [#allocation9], %s648
        // Predicated region
        $region77: #{tpu_custom_call.1} parent=67 // pred_check
          %p650 = pneg %p128
        $region78: #{tpu_custom_call.1} parent=67 // pred_check_branch
          %652 = sbr.rel (%p650) target = $region80
        $region79: #{tpu_custom_call.1} parent=67 // pred_region
          %653 = dma.done %s647, 16
        $region80: #{tpu_custom_call.1} parent=67 // pred_fallthru
          _
        %s654 = sand.u32 %s43, 1
        %s655 = scalar_lea.sflag [#allocation11], %s654
        %s656 = sand.u32 %s141, 1
        %s657 = smul.addr %s656, 16
        %s658 = scalar_lea.vmem [#allocation10], %s657
        // Predicated region
        $region81: #{tpu_custom_call.1} parent=67 // pred_check
          %p659 = pneg %p154
        $region82: #{tpu_custom_call.1} parent=67 // pred_check_branch
          %661 = sbr.rel (%p659) target = $region84
        $region83: #{tpu_custom_call.1} parent=67 // pred_region
          %662 = dma.done %s655, 256
        $region84: #{tpu_custom_call.1} parent=67 // pred_fallthru
          _
        %s663 = sand.u32 %s43, 1
        %s664 = scalar_lea.sflag [#allocation11], %s663
        %s665 = sand.u32 %s167, 1
        %s666 = smul.addr %s665, 16
        %s667 = scalar_lea.vmem [#allocation12], %s666
        // Predicated region
        $region85: #{tpu_custom_call.1} parent=67 // pred_check
          %p668 = pneg %p180
        $region86: #{tpu_custom_call.1} parent=67 // pred_check_branch
          %670 = sbr.rel (%p668) target = $region88
        $region87: #{tpu_custom_call.1} parent=67 // pred_region
          %671 = dma.done %s664, 256
        $region88: #{tpu_custom_call.1} parent=67 // pred_fallthru
          _
        %s672 = sand.u32 %s43, 1
        %s673 = scalar_lea.sflag [#allocation14], %s672
        %s674 = sand.u32 %s193, 1
        %s675 = scalar_lea.vmem [#allocation13], %s674
        // Predicated region
        $region89: #{tpu_custom_call.1} parent=67 // pred_check
          %p676 = pneg %p206
        $region90: #{tpu_custom_call.1} parent=67 // pred_check_branch
          %678 = sbr.rel (%p676) target = $region92
        $region91: #{tpu_custom_call.1} parent=67 // pred_region
          %679 = dma.done %s673, 16
        $region92: #{tpu_custom_call.1} parent=67 // pred_fallthru
          _
        %s680 = sand.u32 %s43, 1
        %s681 = scalar_lea.sflag [#allocation14], %s680
        %s682 = sand.u32 %s219, 1
        %s683 = scalar_lea.vmem [#allocation15], %s682
        // Predicated region
        $region93: #{tpu_custom_call.1} parent=67 // pred_check
          %p684 = pneg %p232
        $region94: #{tpu_custom_call.1} parent=67 // pred_check_branch
          %686 = sbr.rel (%p684) target = $region96
        $region95: #{tpu_custom_call.1} parent=67 // pred_region
          %687 = dma.done %s681, 16
        $region96: #{tpu_custom_call.1} parent=67 // pred_fallthru
          _
        %s688 = sand.u32 %s43, 1
        %s689 = scalar_lea.sflag [#allocation17], %s688
        %s690 = sand.u32 %s245, 1
        %s691 = scalar_lea.vmem [#allocation16], %s690
        // Predicated region
        $region97: #{tpu_custom_call.1} parent=67 // pred_check
          %p692 = pneg %p258
        $region98: #{tpu_custom_call.1} parent=67 // pred_check_branch
          %694 = sbr.rel (%p692) target = $region100
        $region99: #{tpu_custom_call.1} parent=67 // pred_region
          %695 = dma.done %s689, 16
        $region100: #{tpu_custom_call.1} parent=67 // pred_fallthru
          _
        %s696 = sand.u32 %s43, 1
        %s697 = scalar_lea.sflag [#allocation17], %s696
        %s698 = sand.u32 %s271, 1
        %s699 = smul.addr %s698, 16
        %s700 = scalar_lea.vmem [#allocation18], %s699
        // Predicated region
        $region101: #{tpu_custom_call.1} parent=67 // pred_check
          %p701 = pneg %p284
        $region102: #{tpu_custom_call.1} parent=67 // pred_check_branch
          %703 = sbr.rel (%p701) target = $region104
        $region103: #{tpu_custom_call.1} parent=67 // pred_region
          %704 = dma.done %s697, 256
        $region104: #{tpu_custom_call.1} parent=67 // pred_fallthru
          _
        %s705 = sand.u32 %s43, 1
        %s706 = scalar_lea.sflag [#allocation20], %s705
        %s707 = sand.u32 %s297, 1
        %s708 = scalar_lea.vmem [#allocation19], %s707
        // Predicated region
        $region105: #{tpu_custom_call.1} parent=67 // pred_check
          %p709 = pneg %p310
        $region106: #{tpu_custom_call.1} parent=67 // pred_check_branch
          %711 = sbr.rel (%p709) target = $region108
        $region107: #{tpu_custom_call.1} parent=67 // pred_region
          %712 = dma.done %s706, 16
        $region108: #{tpu_custom_call.1} parent=67 // pred_fallthru
          _
        %s713 = sand.u32 %s43, 1
        %s714 = scalar_lea.sflag [#allocation20], %s713
        %s715 = sand.u32 %s323, 1
        %s716 = smul.addr %s715, 64
        %s717 = scalar_lea.vmem [#allocation21], %s716
        // Predicated region
        $region109: #{tpu_custom_call.1} parent=67 // pred_check
          %p718 = pneg %p336
        $region110: #{tpu_custom_call.1} parent=67 // pred_check_branch
          %720 = sbr.rel (%p718) target = $region112
        $region111: #{tpu_custom_call.1} parent=67 // pred_region
          %721 = dma.done %s714, 1024
        $region112: #{tpu_custom_call.1} parent=67 // pred_fallthru
          _
        %s722 = sand.u32 %s349, 1
        %s723 = scalar_lea.sflag [#allocation23], %s722
        %s724 = sand.u32 %s349, 1
        %s725 = scalar_lea.vmem [#allocation22], %s724
        // Predicated region
        $region113: #{tpu_custom_call.1} parent=67 // pred_check
          %p726 = pneg %p362
        $region114: #{tpu_custom_call.1} parent=67 // pred_check_branch
          %728 = sbr.rel (%p726) target = $region116
        $region115: #{tpu_custom_call.1} parent=67 // pred_region
          %729 = dma.done %s723, 16
        $region116: #{tpu_custom_call.1} parent=67 // pred_fallthru
          _
        %p730 = pneg %p76
        %p731 = pneg %p73
        %s732 = sand.u32 %s43, 1
        %s733 = scalar_lea.sflag [#allocation8], %s732
        %s734 = sand.u32 %s89, 1
        %s735 = scalar_lea.vmem [#allocation7], %s734
        %p736 = pneg %p102
        %p737 = pneg %p99
        %s738 = sand.u32 %s43, 1
        %s739 = scalar_lea.sflag [#allocation8], %s738
        %s740 = sand.u32 %s115, 1
        %s741 = scalar_lea.vmem [#allocation9], %s740
        %p742 = pneg %p128
        %p743 = pneg %p125
        %s744 = sand.u32 %s43, 1
        %s745 = scalar_lea.sflag [#allocation11], %s744
        %s746 = sand.u32 %s141, 1
        %s747 = smul.addr %s746, 16
        %s748 = scalar_lea.vmem [#allocation10], %s747
        %p749 = pneg %p154
        %p750 = pneg %p151
        %s751 = sand.u32 %s43, 1
        %s752 = scalar_lea.sflag [#allocation11], %s751
        %s753 = sand.u32 %s167, 1
        %s754 = smul.addr %s753, 16
        %s755 = scalar_lea.vmem [#allocation12], %s754
        %p756 = pneg %p180
        %p757 = pneg %p177
        %s758 = sand.u32 %s43, 1
        %s759 = scalar_lea.sflag [#allocation14], %s758
        %s760 = sand.u32 %s193, 1
        %s761 = scalar_lea.vmem [#allocation13], %s760
        %p762 = pneg %p206
        %p763 = pneg %p203
        %s764 = sand.u32 %s43, 1
        %s765 = scalar_lea.sflag [#allocation14], %s764
        %s766 = sand.u32 %s219, 1
        %s767 = scalar_lea.vmem [#allocation15], %s766
        %p768 = pneg %p232
        %p769 = pneg %p229
        %s770 = sand.u32 %s43, 1
        %s771 = scalar_lea.sflag [#allocation17], %s770
        %s772 = sand.u32 %s245, 1
        %s773 = scalar_lea.vmem [#allocation16], %s772
        %p774 = pneg %p258
        %p775 = pneg %p255
        %s776 = sand.u32 %s43, 1
        %s777 = scalar_lea.sflag [#allocation17], %s776
        %s778 = sand.u32 %s271, 1
        %s779 = smul.addr %s778, 16
        %s780 = scalar_lea.vmem [#allocation18], %s779
        %p781 = pneg %p284
        %p782 = pneg %p281
        %s783 = sand.u32 %s43, 1
        %s784 = scalar_lea.sflag [#allocation20], %s783
        %s785 = sand.u32 %s297, 1
        %s786 = scalar_lea.vmem [#allocation19], %s785
        %p787 = pneg %p310
        %p788 = pneg %p307
        %s789 = sand.u32 %s43, 1
        %s790 = scalar_lea.sflag [#allocation20], %s789
        %s791 = sand.u32 %s323, 1
        %s792 = smul.addr %s791, 64
        %s793 = scalar_lea.vmem [#allocation21], %s792
        %p794 = pneg %p336
        %p795 = pneg %p333
        %s796 = sand.u32 %s349, 1
        %s797 = scalar_lea.sflag [#allocation23], %s796
        %s798 = sand.u32 %s349, 1
        %s799 = scalar_lea.vmem [#allocation22], %s798
        %p800 = pneg %p362
        %p801 = pneg %p359
        %p802 = pneg %p388
        %p803 = pneg %p385
        %s804 = smul.u32 2, %s47
        %s805 = smul.u32 2, %s47
        %p807 = scmp.eq.s32.totalorder %s48, 0
        // Predicated region
        $region117: #{tpu_custom_call.1} parent=67 // pred_check
          %p808 = pneg %p807
        $region118: #{tpu_custom_call.1} parent=67 // pred_check_branch
          %810 = sbr.rel (%p808) target = $region120
        $region119: #{tpu_custom_call.1} parent=67 // pred_region
          %v811 = vld [vmem:[#allocation4] sm:$0xff]
          %v812 = vld [vmem:[#allocation4 + $0x8] sm:$0xff]
          %v813 = vld [vmem:[#allocation4 + $0x10] sm:$0xff]
          %v814 = vld [vmem:[#allocation4 + $0x18] sm:$0xff]
          %vm815 = vcmask 261120
          %816 = vst.msk [vmem:[#allocation2] sm:$0xff] %vm815, %v811
          %817 = vst.msk [vmem:[#allocation2 + $0x8] sm:$0xff] %vm815, %v812
          %818 = vst.msk [vmem:[#allocation2 + $0x10] sm:$0xff] %vm815, %v813
          %819 = vst.msk [vmem:[#allocation2 + $0x18] sm:$0xff] %vm815, %v814
        $region120: #{tpu_custom_call.1} parent=67 // pred_fallthru
          _
        %v820 = vld [vmem:[#allocation2] sm:$0xff]
        %v821 = vld [vmem:[#allocation2 + $0x8] sm:$0xff]
        %v822 = vld [vmem:[#allocation2 + $0x10] sm:$0xff]
        %v823 = vld [vmem:[#allocation2 + $0x18] sm:$0xff]
        %v824 = vld [vmem:[%s641] sm:$0x1]
        %v825 = vld [vmem:[%s649] sm:$0x1]
        %vm826 = vcmask 261120
        %v827 = vsel %vm826, %v820, 0.0
        %828 = vadd.xlane.f32.xlu0 %v827
        %v829 = vpop.xlane.xlu0 %828
        %v830 = vsel %vm826, %v821, 0.0
        %831 = vadd.xlane.f32.xlu0 %v830
        %v832 = vpop.xlane.xlu0 %831
        %v833 = vsel %vm826, %v822, 0.0
        %834 = vadd.xlane.f32.xlu0 %v833
        %v835 = vpop.xlane.xlu0 %834
        %v836 = vsel %vm826, %v823, 0.0
        %837 = vadd.xlane.f32.xlu0 %v836
        %v838 = vpop.xlane.xlu0 %837
        %v839 = vrcp.pop 32.0
        %v840 = vmul.f32 %v829, %v839
        %v841 = vmul.f32 %v832, %v839
        %v842 = vmul.f32 %v835, %v839
        %v843 = vmul.f32 %v838, %v839
        %v844 = vsub.f32 %v820, %v840
        %v845 = vsub.f32 %v821, %v841
        %v846 = vsub.f32 %v822, %v842
        %v847 = vsub.f32 %v823, %v843
        %v848 = vmul.f32 %v844, %v844
        %v849 = vmul.f32 %v845, %v845
        %v850 = vmul.f32 %v846, %v846
        %v851 = vmul.f32 %v847, %v847
        %v852 = vsel %vm826, %v848, 0.0
        %853 = vadd.xlane.f32.xlu0 %v852
        %v854 = vpop.xlane.xlu0 %853
        %v855 = vsel %vm826, %v849, 0.0
        %856 = vadd.xlane.f32.xlu0 %v855
        %v857 = vpop.xlane.xlu0 %856
        %v858 = vsel %vm826, %v850, 0.0
        %859 = vadd.xlane.f32.xlu0 %v858
        %v860 = vpop.xlane.xlu0 %859
        %v861 = vsel %vm826, %v851, 0.0
        %862 = vadd.xlane.f32.xlu0 %v861
        %v863 = vpop.xlane.xlu0 %862
        %v864 = vmul.f32 %v854, %v839
        %v865 = vmul.f32 %v857, %v839
        %v866 = vmul.f32 %v860, %v839
        %v867 = vmul.f32 %v863, %v839
        %v868 = vadd.f32 %v864, 1e-05
        %v869 = vadd.f32 %v865, 1e-05
        %v870 = vadd.f32 %v866, 1e-05
        %v871 = vadd.f32 %v867, 1e-05
        %v872 = vrsqrt.pop %v868
        %v873 = vrsqrt.pop %v869
        %v874 = vrsqrt.pop %v870
        %v875 = vrsqrt.pop %v871
        %v876 = vmul.f32 %v844, %v872
        %v877 = vmul.f32 %v845, %v873
        %v878 = vmul.f32 %v846, %v874
        %v879 = vmul.f32 %v847, %v875
        %v881 = vlaneseq
        %v882 = vshrl.u32 %v881, 7
        %v883 = vsub.s32 0, %v882
        %v884 = vrot.slane %v824, %v883
        %v886 = vmul.f32 %v876, %v884
        %v887 = vmul.f32 %v877, %v884
        %v888 = vmul.f32 %v878, %v884
        %v889 = vmul.f32 %v879, %v884
        %v891 = vlaneseq
        %v892 = vshrl.u32 %v891, 7
        %v893 = vsub.s32 0, %v892
        %v894 = vrot.slane %v825, %v893
        %v896 = vadd.f32 %v886, %v894
        %v897 = vadd.f32 %v887, %v894
        %v898 = vadd.f32 %v888, %v894
        %v899 = vadd.f32 %v889, %v894
        %v900 = vpack.c.bf16 %v897, %v896
        %v901 = vpack.c.bf16 %v899, %v898
        %v902 = vld [vmem:[%s658] sm:$0xf]
        %v903 = vld [vmem:[%s658 + $0x4] sm:$0xf]
        %v904 = vld [vmem:[%s658 + $0x8] sm:$0xf]
        %v905 = vld [vmem:[%s658 + $0xc] sm:$0xf]
        %v910 = vunpack.c.l.b16 %v902
        %v911 = vunpack.c.l.b16 %v903
        %v912 = vunpack.c.l.b16 %v904
        %v913 = vunpack.c.l.b16 %v905
        %v914 = vpack.c.b16 %v911, %v910
        %v915 = vpack.c.b16 %v913, %v912
        %v919 = vsel %vm826, %v900, 0
        %v922 = vsel %vm826, %v901, 0
        %924 = vmatprep.subr.bf16.mxu0 0
        %925 = vmatpush1.bf16.msra.mxu0 %v914
        %926 = vmatprep.subr.bf16.mxu0 0
        %927 = vmatpush1.bf16.msra.mxu0 %v915
        %928 = vmatprep.subr.bf16.mxu0 0
        %929 = vmatpush1.bf16.msra.mxu0 0
        %930 = vmatprep.subr.bf16.mxu0 0
        %931 = vmatpush1.bf16.msra.mxu0 0
        %932 = vmatprep.subr.bf16.mxu0 0
        %933 = vmatpush1.bf16.msra.mxu0 0
        %934 = vmatprep.subr.bf16.mxu0 0
        %935 = vmatpush1.bf16.msra.mxu0 0
        %936 = vmatprep.subr.bf16.mxu0 0
        %937 = vmatpush1.bf16.msra.mxu0 0
        %938 = vmatprep.subr.bf16.mxu0 0
        %939 = vmatpush1.bf16.msra.mxu0 0
        %940 = vmatprep.subr.bf16.mxu0 0
        %941 = vmatpush1.bf16.msra.mxu0 0
        %942 = vmatprep.subr.bf16.mxu0 0
        %943 = vmatpush1.bf16.msra.mxu0 0
        %944 = vmatprep.subr.bf16.mxu0 0
        %945 = vmatpush1.bf16.msra.mxu0 0
        %946 = vmatprep.subr.bf16.mxu0 0
        %947 = vmatpush1.bf16.msra.mxu0 0
        %948 = vmatprep.subr.bf16.mxu0 0
        %949 = vmatpush1.bf16.msra.mxu0 0
        %950 = vmatprep.subr.bf16.mxu0 0
        %951 = vmatpush1.bf16.msra.mxu0 0
        %952 = vmatprep.subr.bf16.mxu0 0
        %953 = vmatpush1.bf16.msra.mxu0 0
        %954 = vmatprep.subr.bf16.mxu0 0
        %955 = vmatpush1.bf16.msra.mxu0 0
        %956 = vmatprep.mubr.bf16.mxu0 0
        %957 = vmatmul.mubr.bf16.gmra.mrb[0].mxu0 %v919
        %v958 = vpop.f32.mrb[0].mxu0
        %v959 = vadd.f32 0.0, %v958
        %v960 = vpop.f32.mrb[0].mxu0
        %v961 = vpop.f32.mrb[0].mxu0
        %v962 = vadd.f32 0.0, %v961
        %v963 = vpop.f32.mrb[0].mxu0
        %964 = vmatprep.mubr.bf16.mxu0 0
        %965 = vmatmul.mubr.bf16.gmra.mrb[0].mxu0 %v922
        %v966 = vpop.f32.mrb[0].mxu0
        %v967 = vadd.f32 0.0, %v966
        %v968 = vpop.f32.mrb[0].mxu0
        %v969 = vpop.f32.mrb[0].mxu0
        %v970 = vadd.f32 0.0, %v969
        %v971 = vpop.f32.mrb[0].mxu0
        %972 = vdwg.mxu0
        %v973 = vpack.c.bf16 %v962, %v959
        %v974 = vpack.c.bf16 %v970, %v967
        %976 = vrot.lane.b32.xlu0 %v973, 96
        %v977 = vpop.permute.xlu0 %976
        %vm978 = vcmask 64512
        %v980 = vsel %vm978, %v973, 0
        %v983 = vsel %vm978, %v977, 0
        %985 = vmatprep.subr.bf16.mxu0 0
        %986 = vmatpush1.bf16.xpose.msra.mxu0 %v983
        %987 = vmatprep.subr.bf16.mxu0 0
        %988 = vmatpush1.bf16.xpose.msra.mxu0 0
        %989 = vmatprep.subr.bf16.mxu0 0
        %990 = vmatpush1.bf16.xpose.msra.mxu0 0
        %991 = vmatprep.subr.bf16.mxu0 0
        %992 = vmatpush1.bf16.xpose.msra.mxu0 0
        %993 = vmatprep.subr.bf16.mxu0 0
        %994 = vmatpush1.bf16.xpose.msra.mxu0 0
        %995 = vmatprep.subr.bf16.mxu0 0
        %996 = vmatpush1.bf16.xpose.msra.mxu0 0
        %997 = vmatprep.subr.bf16.mxu0 0
        %998 = vmatpush1.bf16.xpose.msra.mxu0 0
        %999 = vmatprep.subr.bf16.mxu0 0
        %1000 = vmatpush1.bf16.xpose.msra.mxu0 0
        %1001 = vmatprep.subr.bf16.mxu0 0
        %1002 = vmatpush1.bf16.xpose.msra.mxu0 0
        %1003 = vmatprep.subr.bf16.mxu0 0
        %1004 = vmatpush1.bf16.xpose.msra.mxu0 0
        %1005 = vmatprep.subr.bf16.mxu0 0
        %1006 = vmatpush1.bf16.xpose.msra.mxu0 0
        %1007 = vmatprep.subr.bf16.mxu0 0
        %1008 = vmatpush1.bf16.xpose.msra.mxu0 0
        %1009 = vmatprep.subr.bf16.mxu0 0
        %1010 = vmatpush1.bf16.xpose.msra.mxu0 0
        %1011 = vmatprep.subr.bf16.mxu0 0
        %1012 = vmatpush1.bf16.xpose.msra.mxu0 0
        %1013 = vmatprep.subr.bf16.mxu0 0
        %1014 = vmatpush1.bf16.xpose.msra.mxu0 0
        %1015 = vmatprep.subr.bf16.mxu0 0
        %1016 = vmatpush1.bf16.xpose.msra.mxu0 0
        %1017 = vmatprep.mubr.bf16.mxu0 0
        %1018 = vmatmul.mubr.bf16.gmra.mrb[0].mxu0 %v980
        %v1019 = vpop.f32.mrb[0].mxu0
        %v1020 = vadd.f32 0.0, %v1019
        %v1021 = vpop.f32.mrb[0].mxu0
        %v1022 = vpop.f32.mrb[0].mxu0
        %v1023 = vadd.f32 0.0, %v1022
        %v1024 = vpop.f32.mrb[0].mxu0
        %1025 = vdwg.mxu0
        %1027 = vrot.lane.b32.xlu0 %v974, 96
        %v1028 = vpop.permute.xlu0 %1027
        %v1030 = vsel %vm978, %v974, 0
        %v1033 = vsel %vm978, %v1028, 0
        %1035 = vmatprep.subr.bf16.mxu0 0
        %1036 = vmatpush1.bf16.xpose.msra.mxu0 %v1033
        %1037 = vmatprep.subr.bf16.mxu0 0
        %1038 = vmatpush1.bf16.xpose.msra.mxu0 0
        %1039 = vmatprep.subr.bf16.mxu0 0
        %1040 = vmatpush1.bf16.xpose.msra.mxu0 0
        %1041 = vmatprep.subr.bf16.mxu0 0
        %1042 = vmatpush1.bf16.xpose.msra.mxu0 0
        %1043 = vmatprep.subr.bf16.mxu0 0
        %1044 = vmatpush1.bf16.xpose.msra.mxu0 0
        %1045 = vmatprep.subr.bf16.mxu0 0
        %1046 = vmatpush1.bf16.xpose.msra.mxu0 0
        %1047 = vmatprep.subr.bf16.mxu0 0
        %1048 = vmatpush1.bf16.xpose.msra.mxu0 0
        %1049 = vmatprep.subr.bf16.mxu0 0
        %1050 = vmatpush1.bf16.xpose.msra.mxu0 0
        %1051 = vmatprep.subr.bf16.mxu0 0
        %1052 = vmatpush1.bf16.xpose.msra.mxu0 0
        %1053 = vmatprep.subr.bf16.mxu0 0
        %1054 = vmatpush1.bf16.xpose.msra.mxu0 0
        %1055 = vmatprep.subr.bf16.mxu0 0
        %1056 = vmatpush1.bf16.xpose.msra.mxu0 0
        %1057 = vmatprep.subr.bf16.mxu0 0
        %1058 = vmatpush1.bf16.xpose.msra.mxu0 0
        %1059 = vmatprep.subr.bf16.mxu0 0
        %1060 = vmatpush1.bf16.xpose.msra.mxu0 0
        %1061 = vmatprep.subr.bf16.mxu0 0
        %1062 = vmatpush1.bf16.xpose.msra.mxu0 0
        %1063 = vmatprep.subr.bf16.mxu0 0
        %1064 = vmatpush1.bf16.xpose.msra.mxu0 0
        %1065 = vmatprep.subr.bf16.mxu0 0
        %1066 = vmatpush1.bf16.xpose.msra.mxu0 0
        %1067 = vmatprep.mubr.bf16.mxu0 0
        %1068 = vmatmul.mubr.bf16.gmra.mrb[0].mxu0 %v1030
        %v1069 = vpop.f32.mrb[0].mxu0
        %v1070 = vadd.f32 0.0, %v1069
        %v1071 = vpop.f32.mrb[0].mxu0
        %v1072 = vpop.f32.mrb[0].mxu0
        %v1073 = vadd.f32 0.0, %v1072
        %v1074 = vpop.f32.mrb[0].mxu0
        %1075 = vdwg.mxu0
        %vm1076 = vcmask 130048
        %v1077 = vsel %vm1076, %v1020, -inf
        %1078 = vmax.xlane.f32.xlu0 %v1077
        %v1079 = vpop.xlane.xlu0 %1078
        %v1080 = vsel %vm1076, %v1023, -inf
        %1081 = vmax.xlane.f32.xlu0 %v1080
        %v1082 = vpop.xlane.xlu0 %1081
        %v1083 = vsel %vm1076, %v1070, -inf
        %1084 = vmax.xlane.f32.xlu0 %v1083
        %v1085 = vpop.xlane.xlu0 %1084
        %v1086 = vsel %vm1076, %v1073, -inf
        %1087 = vmax.xlane.f32.xlu0 %v1086
        %v1088 = vpop.xlane.xlu0 %1087
        %v1089 = vsub.f32 %v1020, %v1079
        %v1090 = vsub.f32 %v1023, %v1082
        %v1091 = vsub.f32 %v1070, %v1085
        %v1092 = vsub.f32 %v1073, %v1088
        %v1093 = vmul.f32 %v1089, 1.442695
        %v1094 = vpow.pop %v1093
        %v1095 = vmul.f32 %v1090, 1.442695
        %v1096 = vpow.pop %v1095
        %v1097 = vmul.f32 %v1091, 1.442695
        %v1098 = vpow.pop %v1097
        %v1099 = vmul.f32 %v1092, 1.442695
        %v1100 = vpow.pop %v1099
        %v1101 = vsel %vm1076, %v1094, 0.0
        %1102 = vadd.xlane.f32.xlu0 %v1101
        %v1103 = vpop.xlane.xlu0 %1102
        %v1104 = vsel %vm1076, %v1096, 0.0
        %1105 = vadd.xlane.f32.xlu0 %v1104
        %v1106 = vpop.xlane.xlu0 %1105
        %v1107 = vsel %vm1076, %v1098, 0.0
        %1108 = vadd.xlane.f32.xlu0 %v1107
        %v1109 = vpop.xlane.xlu0 %1108
        %v1110 = vsel %vm1076, %v1100, 0.0
        %1111 = vadd.xlane.f32.xlu0 %v1110
        %v1112 = vpop.xlane.xlu0 %1111
        %v1113 = vrcp.pop %v1103
        %v1114 = vrcp.pop %v1106
        %v1115 = vrcp.pop %v1109
        %v1116 = vrcp.pop %v1112
        %v1117 = vmul.f32 %v1094, %v1113
        %v1118 = vmul.f32 %v1096, %v1114
        %v1119 = vmul.f32 %v1098, %v1115
        %v1120 = vmul.f32 %v1100, %v1116
        %v1121 = vpack.c.bf16 %v1118, %v1117
        %v1122 = vpack.c.bf16 %v1120, %v1119
        %1123 = vrot.lane.b32.xlu0 %v973, 64
        %v1124 = vpop.permute.xlu0 %1123
        %v1127 = vsel %vm1076, %v1121, 0
        %1129 = vmatprep.subr.bf16.mxu0 0
        %1130 = vmatpush1.bf16.msra.mxu0 %v1124
        %1131 = vmatprep.subr.bf16.mxu0 0
        %1132 = vmatpush1.bf16.msra.mxu0 0
        %1133 = vmatprep.subr.bf16.mxu0 0
        %1134 = vmatpush1.bf16.msra.mxu0 0
        %1135 = vmatprep.subr.bf16.mxu0 0
        %1136 = vmatpush1.bf16.msra.mxu0 0
        %1137 = vmatprep.subr.bf16.mxu0 0
        %1138 = vmatpush1.bf16.msra.mxu0 0
        %1139 = vmatprep.subr.bf16.mxu0 0
        %1140 = vmatpush1.bf16.msra.mxu0 0
        %1141 = vmatprep.subr.bf16.mxu0 0
        %1142 = vmatpush1.bf16.msra.mxu0 0
        %1143 = vmatprep.subr.bf16.mxu0 0
        %1144 = vmatpush1.bf16.msra.mxu0 0
        %1145 = vmatprep.subr.bf16.mxu0 0
        %1146 = vmatpush1.bf16.msra.mxu0 0
        %1147 = vmatprep.subr.bf16.mxu0 0
        %1148 = vmatpush1.bf16.msra.mxu0 0
        %1149 = vmatprep.subr.bf16.mxu0 0
        %1150 = vmatpush1.bf16.msra.mxu0 0
        %1151 = vmatprep.subr.bf16.mxu0 0
        %1152 = vmatpush1.bf16.msra.mxu0 0
        %1153 = vmatprep.subr.bf16.mxu0 0
        %1154 = vmatpush1.bf16.msra.mxu0 0
        %1155 = vmatprep.subr.bf16.mxu0 0
        %1156 = vmatpush1.bf16.msra.mxu0 0
        %1157 = vmatprep.subr.bf16.mxu0 0
        %1158 = vmatpush1.bf16.msra.mxu0 0
        %1159 = vmatprep.subr.bf16.mxu0 0
        %1160 = vmatpush1.bf16.msra.mxu0 0
        %1161 = vmatprep.mubr.bf16.mxu0 0
        %1162 = vmatmul.mubr.bf16.gmra.mrb[0].mxu0 %v1127
        %v1163 = vpop.f32.mrb[0].mxu0
        %v1164 = vadd.f32 0.0, %v1163
        %v1165 = vpop.f32.mrb[0].mxu0
        %v1166 = vpop.f32.mrb[0].mxu0
        %v1167 = vadd.f32 0.0, %v1166
        %v1168 = vpop.f32.mrb[0].mxu0
        %1169 = vdwg.mxu0
        %1170 = vrot.lane.b32.xlu0 %v974, 64
        %v1171 = vpop.permute.xlu0 %1170
        %v1174 = vsel %vm1076, %v1122, 0
        %1176 = vmatprep.subr.bf16.mxu0 0
        %1177 = vmatpush1.bf16.msra.mxu0 %v1171
        %1178 = vmatprep.subr.bf16.mxu0 0
        %1179 = vmatpush1.bf16.msra.mxu0 0
        %1180 = vmatprep.subr.bf16.mxu0 0
        %1181 = vmatpush1.bf16.msra.mxu0 0
        %1182 = vmatprep.subr.bf16.mxu0 0
        %1183 = vmatpush1.bf16.msra.mxu0 0
        %1184 = vmatprep.subr.bf16.mxu0 0
        %1185 = vmatpush1.bf16.msra.mxu0 0
        %1186 = vmatprep.subr.bf16.mxu0 0
        %1187 = vmatpush1.bf16.msra.mxu0 0
        %1188 = vmatprep.subr.bf16.mxu0 0
        %1189 = vmatpush1.bf16.msra.mxu0 0
        %1190 = vmatprep.subr.bf16.mxu0 0
        %1191 = vmatpush1.bf16.msra.mxu0 0
        %1192 = vmatprep.subr.bf16.mxu0 0
        %1193 = vmatpush1.bf16.msra.mxu0 0
        %1194 = vmatprep.subr.bf16.mxu0 0
        %1195 = vmatpush1.bf16.msra.mxu0 0
        %1196 = vmatprep.subr.bf16.mxu0 0
        %1197 = vmatpush1.bf16.msra.mxu0 0
        %1198 = vmatprep.subr.bf16.mxu0 0
        %1199 = vmatpush1.bf16.msra.mxu0 0
        %1200 = vmatprep.subr.bf16.mxu0 0
        %1201 = vmatpush1.bf16.msra.mxu0 0
        %1202 = vmatprep.subr.bf16.mxu0 0
        %1203 = vmatpush1.bf16.msra.mxu0 0
        %1204 = vmatprep.subr.bf16.mxu0 0
        %1205 = vmatpush1.bf16.msra.mxu0 0
        %1206 = vmatprep.subr.bf16.mxu0 0
        %1207 = vmatpush1.bf16.msra.mxu0 0
        %1208 = vmatprep.mubr.bf16.mxu0 0
        %1209 = vmatmul.mubr.bf16.gmra.mrb[0].mxu0 %v1174
        %v1210 = vpop.f32.mrb[0].mxu0
        %v1211 = vadd.f32 0.0, %v1210
        %v1212 = vpop.f32.mrb[0].mxu0
        %v1213 = vpop.f32.mrb[0].mxu0
        %v1214 = vadd.f32 0.0, %v1213
        %v1215 = vpop.f32.mrb[0].mxu0
        %1216 = vdwg.mxu0
        %v1217 = vpack.c.bf16 %v1167, %v1164
        %v1218 = vpack.c.bf16 %v1214, %v1211
        %1219 = vst.msk [vmem:[#allocation3] sm:$0xff] %vm978, %v1217
        %1220 = vst.msk [vmem:[#allocation3 + $0x8] sm:$0xff] %vm978, %v1218
        %1221 = vrot.lane.b32.xlu0 %v973, 120
        %v1222 = vpop.permute.xlu0 %1221
        %1223 = vrot.lane.b32.xlu0 %v973, 88
        %v1224 = vpop.permute.xlu0 %1223
        %v1226 = vsel %vm978, %v1222, 0
        %v1229 = vsel %vm978, %v1224, 0
        %1231 = vmatprep.subr.bf16.mxu0 0
        %1232 = vmatpush1.bf16.xpose.msra.mxu0 %v1229
        %1233 = vmatprep.subr.bf16.mxu0 0
        %1234 = vmatpush1.bf16.xpose.msra.mxu0 0
        %1235 = vmatprep.subr.bf16.mxu0 0
        %1236 = vmatpush1.bf16.xpose.msra.mxu0 0
        %1237 = vmatprep.subr.bf16.mxu0 0
        %1238 = vmatpush1.bf16.xpose.msra.mxu0 0
        %1239 = vmatprep.subr.bf16.mxu0 0
        %1240 = vmatpush1.bf16.xpose.msra.mxu0 0
        %1241 = vmatprep.subr.bf16.mxu0 0
        %1242 = vmatpush1.bf16.xpose.msra.mxu0 0
        %1243 = vmatprep.subr.bf16.mxu0 0
        %1244 = vmatpush1.bf16.xpose.msra.mxu0 0
        %1245 = vmatprep.subr.bf16.mxu0 0
        %1246 = vmatpush1.bf16.xpose.msra.mxu0 0
        %1247 = vmatprep.subr.bf16.mxu0 0
        %1248 = vmatpush1.bf16.xpose.msra.mxu0 0
        %1249 = vmatprep.subr.bf16.mxu0 0
        %1250 = vmatpush1.bf16.xpose.msra.mxu0 0
        %1251 = vmatprep.subr.bf16.mxu0 0
        %1252 = vmatpush1.bf16.xpose.msra.mxu0 0
        %1253 = vmatprep.subr.bf16.mxu0 0
        %1254 = vmatpush1.bf16.xpose.msra.mxu0 0
        %1255 = vmatprep.subr.bf16.mxu0 0
        %1256 = vmatpush1.bf16.xpose.msra.mxu0 0
        %1257 = vmatprep.subr.bf16.mxu0 0
        %1258 = vmatpush1.bf16.xpose.msra.mxu0 0
        %1259 = vmatprep.subr.bf16.mxu0 0
        %1260 = vmatpush1.bf16.xpose.msra.mxu0 0
        %1261 = vmatprep.subr.bf16.mxu0 0
        %1262 = vmatpush1.bf16.xpose.msra.mxu0 0
        %1263 = vmatprep.mubr.bf16.mxu0 0
        %1264 = vmatmul.mubr.bf16.gmra.mrb[0].mxu0 %v1226
        %v1265 = vpop.f32.mrb[0].mxu0
        %v1266 = vadd.f32 0.0, %v1265
        %v1267 = vpop.f32.mrb[0].mxu0
        %v1268 = vpop.f32.mrb[0].mxu0
        %v1269 = vadd.f32 0.0, %v1268
        %v1270 = vpop.f32.mrb[0].mxu0
        %1271 = vdwg.mxu0
        %1272 = vrot.lane.b32.xlu0 %v974, 120
        %v1273 = vpop.permute.xlu0 %1272
        %1274 = vrot.lane.b32.xlu0 %v974, 88
        %v1275 = vpop.permute.xlu0 %1274
        %v1277 = vsel %vm978, %v1273, 0
        %v1280 = vsel %vm978, %v1275, 0
        %1282 = vmatprep.subr.bf16.mxu0 0
        %1283 = vmatpush1.bf16.xpose.msra.mxu0 %v1280
        %1284 = vmatprep.subr.bf16.mxu0 0
        %1285 = vmatpush1.bf16.xpose.msra.mxu0 0
        %1286 = vmatprep.subr.bf16.mxu0 0
        %1287 = vmatpush1.bf16.xpose.msra.mxu0 0
        %1288 = vmatprep.subr.bf16.mxu0 0
        %1289 = vmatpush1.bf16.xpose.msra.mxu0 0
        %1290 = vmatprep.subr.bf16.mxu0 0
        %1291 = vmatpush1.bf16.xpose.msra.mxu0 0
        %1292 = vmatprep.subr.bf16.mxu0 0
        %1293 = vmatpush1.bf16.xpose.msra.mxu0 0
        %1294 = vmatprep.subr.bf16.mxu0 0
        %1295 = vmatpush1.bf16.xpose.msra.mxu0 0
        %1296 = vmatprep.subr.bf16.mxu0 0
        %1297 = vmatpush1.bf16.xpose.msra.mxu0 0
        %1298 = vmatprep.subr.bf16.mxu0 0
        %1299 = vmatpush1.bf16.xpose.msra.mxu0 0
        %1300 = vmatprep.subr.bf16.mxu0 0
        %1301 = vmatpush1.bf16.xpose.msra.mxu0 0
        %1302 = vmatprep.subr.bf16.mxu0 0
        %1303 = vmatpush1.bf16.xpose.msra.mxu0 0
        %1304 = vmatprep.subr.bf16.mxu0 0
        %1305 = vmatpush1.bf16.xpose.msra.mxu0 0
        %1306 = vmatprep.subr.bf16.mxu0 0
        %1307 = vmatpush1.bf16.xpose.msra.mxu0 0
        %1308 = vmatprep.subr.bf16.mxu0 0
        %1309 = vmatpush1.bf16.xpose.msra.mxu0 0
        %1310 = vmatprep.subr.bf16.mxu0 0
        %1311 = vmatpush1.bf16.xpose.msra.mxu0 0
        %1312 = vmatprep.subr.bf16.mxu0 0
        %1313 = vmatpush1.bf16.xpose.msra.mxu0 0
        %1314 = vmatprep.mubr.bf16.mxu0 0
        %1315 = vmatmul.mubr.bf16.gmra.mrb[0].mxu0 %v1277
        %v1316 = vpop.f32.mrb[0].mxu0
        %v1317 = vadd.f32 0.0, %v1316
        %v1318 = vpop.f32.mrb[0].mxu0
        %v1319 = vpop.f32.mrb[0].mxu0
        %v1320 = vadd.f32 0.0, %v1319
        %v1321 = vpop.f32.mrb[0].mxu0
        %1322 = vdwg.mxu0
        %v1323 = vsel %vm1076, %v1266, -inf
        %1324 = vmax.xlane.f32.xlu0 %v1323
        %v1325 = vpop.xlane.xlu0 %1324
        %v1326 = vsel %vm1076, %v1269, -inf
        %1327 = vmax.xlane.f32.xlu0 %v1326
        %v1328 = vpop.xlane.xlu0 %1327
        %v1329 = vsel %vm1076, %v1317, -inf
        %1330 = vmax.xlane.f32.xlu0 %v1329
        %v1331 = vpop.xlane.xlu0 %1330
        %v1332 = vsel %vm1076, %v1320, -inf
        %1333 = vmax.xlane.f32.xlu0 %v1332
        %v1334 = vpop.xlane.xlu0 %1333
        %v1335 = vsub.f32 %v1266, %v1325
        %v1336 = vsub.f32 %v1269, %v1328
        %v1337 = vsub.f32 %v1317, %v1331
        %v1338 = vsub.f32 %v1320, %v1334
        %v1339 = vmul.f32 %v1335, 1.442695
        %v1340 = vpow.pop %v1339
        %v1341 = vmul.f32 %v1336, 1.442695
        %v1342 = vpow.pop %v1341
        %v1343 = vmul.f32 %v1337, 1.442695
        %v1344 = vpow.pop %v1343
        %v1345 = vmul.f32 %v1338, 1.442695
        %v1346 = vpow.pop %v1345
        %v1347 = vsel %vm1076, %v1340, 0.0
        %1348 = vadd.xlane.f32.xlu0 %v1347
        %v1349 = vpop.xlane.xlu0 %1348
        %v1350 = vsel %vm1076, %v1342, 0.0
        %1351 = vadd.xlane.f32.xlu0 %v1350
        %v1352 = vpop.xlane.xlu0 %1351
        %v1353 = vsel %vm1076, %v1344, 0.0
        %1354 = vadd.xlane.f32.xlu0 %v1353
        %v1355 = vpop.xlane.xlu0 %1354
        %v1356 = vsel %vm1076, %v1346, 0.0
        %1357 = vadd.xlane.f32.xlu0 %v1356
        %v1358 = vpop.xlane.xlu0 %1357
        %v1359 = vrcp.pop %v1349
        %v1360 = vrcp.pop %v1352
        %v1361 = vrcp.pop %v1355
        %v1362 = vrcp.pop %v1358
        %v1363 = vmul.f32 %v1340, %v1359
        %v1364 = vmul.f32 %v1342, %v1360
        %v1365 = vmul.f32 %v1344, %v1361
        %v1366 = vmul.f32 %v1346, %v1362
        %v1367 = vpack.c.bf16 %v1364, %v1363
        %v1368 = vpack.c.bf16 %v1366, %v1365
        %1369 = vrot.lane.b32.xlu0 %v973, 56
        %v1370 = vpop.permute.xlu0 %1369
        %v1373 = vsel %vm1076, %v1367, 0
        %1375 = vmatprep.subr.bf16.mxu0 0
        %1376 = vmatpush1.bf16.msra.mxu0 %v1370
        %1377 = vmatprep.subr.bf16.mxu0 0
        %1378 = vmatpush1.bf16.msra.mxu0 0
        %1379 = vmatprep.subr.bf16.mxu0 0
        %1380 = vmatpush1.bf16.msra.mxu0 0
        %1381 = vmatprep.subr.bf16.mxu0 0
        %1382 = vmatpush1.bf16.msra.mxu0 0
        %1383 = vmatprep.subr.bf16.mxu0 0
        %1384 = vmatpush1.bf16.msra.mxu0 0
        %1385 = vmatprep.subr.bf16.mxu0 0
        %1386 = vmatpush1.bf16.msra.mxu0 0
        %1387 = vmatprep.subr.bf16.mxu0 0
        %1388 = vmatpush1.bf16.msra.mxu0 0
        %1389 = vmatprep.subr.bf16.mxu0 0
        %1390 = vmatpush1.bf16.msra.mxu0 0
        %1391 = vmatprep.subr.bf16.mxu0 0
        %1392 = vmatpush1.bf16.msra.mxu0 0
        %1393 = vmatprep.subr.bf16.mxu0 0
        %1394 = vmatpush1.bf16.msra.mxu0 0
        %1395 = vmatprep.subr.bf16.mxu0 0
        %1396 = vmatpush1.bf16.msra.mxu0 0
        %1397 = vmatprep.subr.bf16.mxu0 0
        %1398 = vmatpush1.bf16.msra.mxu0 0
        %1399 = vmatprep.subr.bf16.mxu0 0
        %1400 = vmatpush1.bf16.msra.mxu0 0
        %1401 = vmatprep.subr.bf16.mxu0 0
        %1402 = vmatpush1.bf16.msra.mxu0 0
        %1403 = vmatprep.subr.bf16.mxu0 0
        %1404 = vmatpush1.bf16.msra.mxu0 0
        %1405 = vmatprep.subr.bf16.mxu0 0
        %1406 = vmatpush1.bf16.msra.mxu0 0
        %1407 = vmatprep.mubr.bf16.mxu0 0
        %1408 = vmatmul.mubr.bf16.gmra.mrb[0].mxu0 %v1373
        %v1409 = vpop.f32.mrb[0].mxu0
        %v1410 = vadd.f32 0.0, %v1409
        %v1411 = vpop.f32.mrb[0].mxu0
        %v1412 = vpop.f32.mrb[0].mxu0
        %v1413 = vadd.f32 0.0, %v1412
        %v1414 = vpop.f32.mrb[0].mxu0
        %1415 = vdwg.mxu0
        %1416 = vrot.lane.b32.xlu0 %v974, 56
        %v1417 = vpop.permute.xlu0 %1416
        %v1420 = vsel %vm1076, %v1368, 0
        %1422 = vmatprep.subr.bf16.mxu0 0
        %1423 = vmatpush1.bf16.msra.mxu0 %v1417
        %1424 = vmatprep.subr.bf16.mxu0 0
        %1425 = vmatpush1.bf16.msra.mxu0 0
        %1426 = vmatprep.subr.bf16.mxu0 0
        %1427 = vmatpush1.bf16.msra.mxu0 0
        %1428 = vmatprep.subr.bf16.mxu0 0
        %1429 = vmatpush1.bf16.msra.mxu0 0
        %1430 = vmatprep.subr.bf16.mxu0 0
        %1431 = vmatpush1.bf16.msra.mxu0 0
        %1432 = vmatprep.subr.bf16.mxu0 0
        %1433 = vmatpush1.bf16.msra.mxu0 0
        %1434 = vmatprep.subr.bf16.mxu0 0
        %1435 = vmatpush1.bf16.msra.mxu0 0
        %1436 = vmatprep.subr.bf16.mxu0 0
        %1437 = vmatpush1.bf16.msra.mxu0 0
        %1438 = vmatprep.subr.bf16.mxu0 0
        %1439 = vmatpush1.bf16.msra.mxu0 0
        %1440 = vmatprep.subr.bf16.mxu0 0
        %1441 = vmatpush1.bf16.msra.mxu0 0
        %1442 = vmatprep.subr.bf16.mxu0 0
        %1443 = vmatpush1.bf16.msra.mxu0 0
        %1444 = vmatprep.subr.bf16.mxu0 0
        %1445 = vmatpush1.bf16.msra.mxu0 0
        %1446 = vmatprep.subr.bf16.mxu0 0
        %1447 = vmatpush1.bf16.msra.mxu0 0
        %1448 = vmatprep.subr.bf16.mxu0 0
        %1449 = vmatpush1.bf16.msra.mxu0 0
        %1450 = vmatprep.subr.bf16.mxu0 0
        %1451 = vmatpush1.bf16.msra.mxu0 0
        %1452 = vmatprep.subr.bf16.mxu0 0
        %1453 = vmatpush1.bf16.msra.mxu0 0
        %1454 = vmatprep.mubr.bf16.mxu0 0
        %1455 = vmatmul.mubr.bf16.gmra.mrb[0].mxu0 %v1420
        %v1456 = vpop.f32.mrb[0].mxu0
        %v1457 = vadd.f32 0.0, %v1456
        %v1458 = vpop.f32.mrb[0].mxu0
        %v1459 = vpop.f32.mrb[0].mxu0
        %v1460 = vadd.f32 0.0, %v1459
        %v1461 = vpop.f32.mrb[0].mxu0
        %1462 = vdwg.mxu0
        %v1463 = vpack.c.bf16 %v1413, %v1410
        %v1464 = vpack.c.bf16 %v1460, %v1457
        %1467 = vrot.lane.b32.xlu0 %v1463, 8
        %v1468 = vpop.permute.xlu0 %1467
        %1469 = vrot.lane.b32.xlu0 %v1464, 8
        %v1470 = vpop.permute.xlu0 %1469
        %vm1473 = vcmask 130112
        %1474 = vst.msk [vmem:[#allocation3] sm:$0xff] %vm1473, %v1468
        %1475 = vst.msk [vmem:[#allocation3 + $0x8] sm:$0xff] %vm1473, %v1470
        %1476 = vrot.lane.b32.xlu0 %v973, 112
        %v1477 = vpop.permute.xlu0 %1476
        %1478 = vrot.lane.b32.xlu0 %v973, 80
        %v1479 = vpop.permute.xlu0 %1478
        %v1481 = vsel %vm978, %v1477, 0
        %v1484 = vsel %vm978, %v1479, 0
        %1486 = vmatprep.subr.bf16.mxu0 0
        %1487 = vmatpush1.bf16.xpose.msra.mxu0 %v1484
        %1488 = vmatprep.subr.bf16.mxu0 0
        %1489 = vmatpush1.bf16.xpose.msra.mxu0 0
        %1490 = vmatprep.subr.bf16.mxu0 0
        %1491 = vmatpush1.bf16.xpose.msra.mxu0 0
        %1492 = vmatprep.subr.bf16.mxu0 0
        %1493 = vmatpush1.bf16.xpose.msra.mxu0 0
        %1494 = vmatprep.subr.bf16.mxu0 0
        %1495 = vmatpush1.bf16.xpose.msra.mxu0 0
        %1496 = vmatprep.subr.bf16.mxu0 0
        %1497 = vmatpush1.bf16.xpose.msra.mxu0 0
        %1498 = vmatprep.subr.bf16.mxu0 0
        %1499 = vmatpush1.bf16.xpose.msra.mxu0 0
        %1500 = vmatprep.subr.bf16.mxu0 0
        %1501 = vmatpush1.bf16.xpose.msra.mxu0 0
        %1502 = vmatprep.subr.bf16.mxu0 0
        %1503 = vmatpush1.bf16.xpose.msra.mxu0 0
        %1504 = vmatprep.subr.bf16.mxu0 0
        %1505 = vmatpush1.bf16.xpose.msra.mxu0 0
        %1506 = vmatprep.subr.bf16.mxu0 0
        %1507 = vmatpush1.bf16.xpose.msra.mxu0 0
        %1508 = vmatprep.subr.bf16.mxu0 0
        %1509 = vmatpush1.bf16.xpose.msra.mxu0 0
        %1510 = vmatprep.subr.bf16.mxu0 0
        %1511 = vmatpush1.bf16.xpose.msra.mxu0 0
        %1512 = vmatprep.subr.bf16.mxu0 0
        %1513 = vmatpush1.bf16.xpose.msra.mxu0 0
        %1514 = vmatprep.subr.bf16.mxu0 0
        %1515 = vmatpush1.bf16.xpose.msra.mxu0 0
        %1516 = vmatprep.subr.bf16.mxu0 0
        %1517 = vmatpush1.bf16.xpose.msra.mxu0 0
        %1518 = vmatprep.mubr.bf16.mxu0 0
        %1519 = vmatmul.mubr.bf16.gmra.mrb[0].mxu0 %v1481
        %v1520 = vpop.f32.mrb[0].mxu0
        %v1521 = vadd.f32 0.0, %v1520
        %v1522 = vpop.f32.mrb[0].mxu0
        %v1523 = vpop.f32.mrb[0].mxu0
        %v1524 = vadd.f32 0.0, %v1523
        %v1525 = vpop.f32.mrb[0].mxu0
        %1526 = vdwg.mxu0
        %1527 = vrot.lane.b32.xlu0 %v974, 112
        %v1528 = vpop.permute.xlu0 %1527
        %1529 = vrot.lane.b32.xlu0 %v974, 80
        %v1530 = vpop.permute.xlu0 %1529
        %v1532 = vsel %vm978, %v1528, 0
        %v1535 = vsel %vm978, %v1530, 0
        %1537 = vmatprep.subr.bf16.mxu0 0
        %1538 = vmatpush1.bf16.xpose.msra.mxu0 %v1535
        %1539 = vmatprep.subr.bf16.mxu0 0
        %1540 = vmatpush1.bf16.xpose.msra.mxu0 0
        %1541 = vmatprep.subr.bf16.mxu0 0
        %1542 = vmatpush1.bf16.xpose.msra.mxu0 0
        %1543 = vmatprep.subr.bf16.mxu0 0
        %1544 = vmatpush1.bf16.xpose.msra.mxu0 0
        %1545 = vmatprep.subr.bf16.mxu0 0
        %1546 = vmatpush1.bf16.xpose.msra.mxu0 0
        %1547 = vmatprep.subr.bf16.mxu0 0
        %1548 = vmatpush1.bf16.xpose.msra.mxu0 0
        %1549 = vmatprep.subr.bf16.mxu0 0
        %1550 = vmatpush1.bf16.xpose.msra.mxu0 0
        %1551 = vmatprep.subr.bf16.mxu0 0
        %1552 = vmatpush1.bf16.xpose.msra.mxu0 0
        %1553 = vmatprep.subr.bf16.mxu0 0
        %1554 = vmatpush1.bf16.xpose.msra.mxu0 0
        %1555 = vmatprep.subr.bf16.mxu0 0
        %1556 = vmatpush1.bf16.xpose.msra.mxu0 0
        %1557 = vmatprep.subr.bf16.mxu0 0
        %1558 = vmatpush1.bf16.xpose.msra.mxu0 0
        %1559 = vmatprep.subr.bf16.mxu0 0
        %1560 = vmatpush1.bf16.xpose.msra.mxu0 0
        %1561 = vmatprep.subr.bf16.mxu0 0
        %1562 = vmatpush1.bf16.xpose.msra.mxu0 0
        %1563 = vmatprep.subr.bf16.mxu0 0
        %1564 = vmatpush1.bf16.xpose.msra.mxu0 0
        %1565 = vmatprep.subr.bf16.mxu0 0
        %1566 = vmatpush1.bf16.xpose.msra.mxu0 0
        %1567 = vmatprep.subr.bf16.mxu0 0
        %1568 = vmatpush1.bf16.xpose.msra.mxu0 0
        %1569 = vmatprep.mubr.bf16.mxu0 0
        %1570 = vmatmul.mubr.bf16.gmra.mrb[0].mxu0 %v1532
        %v1571 = vpop.f32.mrb[0].mxu0
        %v1572 = vadd.f32 0.0, %v1571
        %v1573 = vpop.f32.mrb[0].mxu0
        %v1574 = vpop.f32.mrb[0].mxu0
        %v1575 = vadd.f32 0.0, %v1574
        %v1576 = vpop.f32.mrb[0].mxu0
        %1577 = vdwg.mxu0
        %v1578 = vsel %vm1076, %v1521, -inf
        %1579 = vmax.xlane.f32.xlu0 %v1578
        %v1580 = vpop.xlane.xlu0 %1579
        %v1581 = vsel %vm1076, %v1524, -inf
        %1582 = vmax.xlane.f32.xlu0 %v1581
        %v1583 = vpop.xlane.xlu0 %1582
        %v1584 = vsel %vm1076, %v1572, -inf
        %1585 = vmax.xlane.f32.xlu0 %v1584
        %v1586 = vpop.xlane.xlu0 %1585
        %v1587 = vsel %vm1076, %v1575, -inf
        %1588 = vmax.xlane.f32.xlu0 %v1587
        %v1589 = vpop.xlane.xlu0 %1588
        %v1590 = vsub.f32 %v1521, %v1580
        %v1591 = vsub.f32 %v1524, %v1583
        %v1592 = vsub.f32 %v1572, %v1586
        %v1593 = vsub.f32 %v1575, %v1589
        %v1594 = vmul.f32 %v1590, 1.442695
        %v1595 = vpow.pop %v1594
        %v1596 = vmul.f32 %v1591, 1.442695
        %v1597 = vpow.pop %v1596
        %v1598 = vmul.f32 %v1592, 1.442695
        %v1599 = vpow.pop %v1598
        %v1600 = vmul.f32 %v1593, 1.442695
        %v1601 = vpow.pop %v1600
        %v1602 = vsel %vm1076, %v1595, 0.0
        %1603 = vadd.xlane.f32.xlu0 %v1602
        %v1604 = vpop.xlane.xlu0 %1603
        %v1605 = vsel %vm1076, %v1597, 0.0
        %1606 = vadd.xlane.f32.xlu0 %v1605
        %v1607 = vpop.xlane.xlu0 %1606
        %v1608 = vsel %vm1076, %v1599, 0.0
        %1609 = vadd.xlane.f32.xlu0 %v1608
        %v1610 = vpop.xlane.xlu0 %1609
        %v1611 = vsel %vm1076, %v1601, 0.0
        %1612 = vadd.xlane.f32.xlu0 %v1611
        %v1613 = vpop.xlane.xlu0 %1612
        %v1614 = vrcp.pop %v1604
        %v1615 = vrcp.pop %v1607
        %v1616 = vrcp.pop %v1610
        %v1617 = vrcp.pop %v1613
        %v1618 = vmul.f32 %v1595, %v1614
        %v1619 = vmul.f32 %v1597, %v1615
        %v1620 = vmul.f32 %v1599, %v1616
        %v1621 = vmul.f32 %v1601, %v1617
        %v1622 = vpack.c.bf16 %v1619, %v1618
        %v1623 = vpack.c.bf16 %v1621, %v1620
        %1624 = vrot.lane.b32.xlu0 %v973, 48
        %v1625 = vpop.permute.xlu0 %1624
        %v1628 = vsel %vm1076, %v1622, 0
        %1630 = vmatprep.subr.bf16.mxu0 0
        %1631 = vmatpush1.bf16.msra.mxu0 %v1625
        %1632 = vmatprep.subr.bf16.mxu0 0
        %1633 = vmatpush1.bf16.msra.mxu0 0
        %1634 = vmatprep.subr.bf16.mxu0 0
        %1635 = vmatpush1.bf16.msra.mxu0 0
        %1636 = vmatprep.subr.bf16.mxu0 0
        %1637 = vmatpush1.bf16.msra.mxu0 0
        %1638 = vmatprep.subr.bf16.mxu0 0
        %1639 = vmatpush1.bf16.msra.mxu0 0
        %1640 = vmatprep.subr.bf16.mxu0 0
        %1641 = vmatpush1.bf16.msra.mxu0 0
        %1642 = vmatprep.subr.bf16.mxu0 0
        %1643 = vmatpush1.bf16.msra.mxu0 0
        %1644 = vmatprep.subr.bf16.mxu0 0
        %1645 = vmatpush1.bf16.msra.mxu0 0
        %1646 = vmatprep.subr.bf16.mxu0 0
        %1647 = vmatpush1.bf16.msra.mxu0 0
        %1648 = vmatprep.subr.bf16.mxu0 0
        %1649 = vmatpush1.bf16.msra.mxu0 0
        %1650 = vmatprep.subr.bf16.mxu0 0
        %1651 = vmatpush1.bf16.msra.mxu0 0
        %1652 = vmatprep.subr.bf16.mxu0 0
        %1653 = vmatpush1.bf16.msra.mxu0 0
        %1654 = vmatprep.subr.bf16.mxu0 0
        %1655 = vmatpush1.bf16.msra.mxu0 0
        %1656 = vmatprep.subr.bf16.mxu0 0
        %1657 = vmatpush1.bf16.msra.mxu0 0
        %1658 = vmatprep.subr.bf16.mxu0 0
        %1659 = vmatpush1.bf16.msra.mxu0 0
        %1660 = vmatprep.subr.bf16.mxu0 0
        %1661 = vmatpush1.bf16.msra.mxu0 0
        %1662 = vmatprep.mubr.bf16.mxu0 0
        %1663 = vmatmul.mubr.bf16.gmra.mrb[0].mxu0 %v1628
        %v1664 = vpop.f32.mrb[0].mxu0
        %v1665 = vadd.f32 0.0, %v1664
        %v1666 = vpop.f32.mrb[0].mxu0
        %v1667 = vpop.f32.mrb[0].mxu0
        %v1668 = vadd.f32 0.0, %v1667
        %v1669 = vpop.f32.mrb[0].mxu0
        %1670 = vdwg.mxu0
        %1671 = vrot.lane.b32.xlu0 %v974, 48
        %v1672 = vpop.permute.xlu0 %1671
        %v1675 = vsel %vm1076, %v1623, 0
        %1677 = vmatprep.subr.bf16.mxu0 0
        %1678 = vmatpush1.bf16.msra.mxu0 %v1672
        %1679 = vmatprep.subr.bf16.mxu0 0
        %1680 = vmatpush1.bf16.msra.mxu0 0
        %1681 = vmatprep.subr.bf16.mxu0 0
        %1682 = vmatpush1.bf16.msra.mxu0 0
        %1683 = vmatprep.subr.bf16.mxu0 0
        %1684 = vmatpush1.bf16.msra.mxu0 0
        %1685 = vmatprep.subr.bf16.mxu0 0
        %1686 = vmatpush1.bf16.msra.mxu0 0
        %1687 = vmatprep.subr.bf16.mxu0 0
        %1688 = vmatpush1.bf16.msra.mxu0 0
        %1689 = vmatprep.subr.bf16.mxu0 0
        %1690 = vmatpush1.bf16.msra.mxu0 0
        %1691 = vmatprep.subr.bf16.mxu0 0
        %1692 = vmatpush1.bf16.msra.mxu0 0
        %1693 = vmatprep.subr.bf16.mxu0 0
        %1694 = vmatpush1.bf16.msra.mxu0 0
        %1695 = vmatprep.subr.bf16.mxu0 0
        %1696 = vmatpush1.bf16.msra.mxu0 0
        %1697 = vmatprep.subr.bf16.mxu0 0
        %1698 = vmatpush1.bf16.msra.mxu0 0
        %1699 = vmatprep.subr.bf16.mxu0 0
        %1700 = vmatpush1.bf16.msra.mxu0 0
        %1701 = vmatprep.subr.bf16.mxu0 0
        %1702 = vmatpush1.bf16.msra.mxu0 0
        %1703 = vmatprep.subr.bf16.mxu0 0
        %1704 = vmatpush1.bf16.msra.mxu0 0
        %1705 = vmatprep.subr.bf16.mxu0 0
        %1706 = vmatpush1.bf16.msra.mxu0 0
        %1707 = vmatprep.subr.bf16.mxu0 0
        %1708 = vmatpush1.bf16.msra.mxu0 0
        %1709 = vmatprep.mubr.bf16.mxu0 0
        %1710 = vmatmul.mubr.bf16.gmra.mrb[0].mxu0 %v1675
        %v1711 = vpop.f32.mrb[0].mxu0
        %v1712 = vadd.f32 0.0, %v1711
        %v1713 = vpop.f32.mrb[0].mxu0
        %v1714 = vpop.f32.mrb[0].mxu0
        %v1715 = vadd.f32 0.0, %v1714
        %v1716 = vpop.f32.mrb[0].mxu0
        %1717 = vdwg.mxu0
        %v1718 = vpack.c.bf16 %v1668, %v1665
        %v1719 = vpack.c.bf16 %v1715, %v1712
        %1722 = vrot.lane.b32.xlu0 %v1718, 16
        %v1723 = vpop.permute.xlu0 %1722
        %1724 = vrot.lane.b32.xlu0 %v1719, 16
        %v1725 = vpop.permute.xlu0 %1724
        %vm1728 = vcmask 195712
        %1729 = vst.msk [vmem:[#allocation3] sm:$0xff] %vm1728, %v1723
        %1730 = vst.msk [vmem:[#allocation3 + $0x8] sm:$0xff] %vm1728, %v1725
        %1731 = vrot.lane.b32.xlu0 %v973, 104
        %v1732 = vpop.permute.xlu0 %1731
        %1733 = vrot.lane.b32.xlu0 %v973, 72
        %v1734 = vpop.permute.xlu0 %1733
        %v1736 = vsel %vm978, %v1732, 0
        %v1739 = vsel %vm978, %v1734, 0
        %1741 = vmatprep.subr.bf16.mxu0 0
        %1742 = vmatpush1.bf16.xpose.msra.mxu0 %v1739
        %1743 = vmatprep.subr.bf16.mxu0 0
        %1744 = vmatpush1.bf16.xpose.msra.mxu0 0
        %1745 = vmatprep.subr.bf16.mxu0 0
        %1746 = vmatpush1.bf16.xpose.msra.mxu0 0
        %1747 = vmatprep.subr.bf16.mxu0 0
        %1748 = vmatpush1.bf16.xpose.msra.mxu0 0
        %1749 = vmatprep.subr.bf16.mxu0 0
        %1750 = vmatpush1.bf16.xpose.msra.mxu0 0
        %1751 = vmatprep.subr.bf16.mxu0 0
        %1752 = vmatpush1.bf16.xpose.msra.mxu0 0
        %1753 = vmatprep.subr.bf16.mxu0 0
        %1754 = vmatpush1.bf16.xpose.msra.mxu0 0
        %1755 = vmatprep.subr.bf16.mxu0 0
        %1756 = vmatpush1.bf16.xpose.msra.mxu0 0
        %1757 = vmatprep.subr.bf16.mxu0 0
        %1758 = vmatpush1.bf16.xpose.msra.mxu0 0
        %1759 = vmatprep.subr.bf16.mxu0 0
        %1760 = vmatpush1.bf16.xpose.msra.mxu0 0
        %1761 = vmatprep.subr.bf16.mxu0 0
        %1762 = vmatpush1.bf16.xpose.msra.mxu0 0
        %1763 = vmatprep.subr.bf16.mxu0 0
        %1764 = vmatpush1.bf16.xpose.msra.mxu0 0
        %1765 = vmatprep.subr.bf16.mxu0 0
        %1766 = vmatpush1.bf16.xpose.msra.mxu0 0
        %1767 = vmatprep.subr.bf16.mxu0 0
        %1768 = vmatpush1.bf16.xpose.msra.mxu0 0
        %1769 = vmatprep.subr.bf16.mxu0 0
        %1770 = vmatpush1.bf16.xpose.msra.mxu0 0
        %1771 = vmatprep.subr.bf16.mxu0 0
        %1772 = vmatpush1.bf16.xpose.msra.mxu0 0
        %1773 = vmatprep.mubr.bf16.mxu0 0
        %1774 = vmatmul.mubr.bf16.gmra.mrb[0].mxu0 %v1736
        %v1775 = vpop.f32.mrb[0].mxu0
        %v1776 = vadd.f32 0.0, %v1775
        %v1777 = vpop.f32.mrb[0].mxu0
        %v1778 = vpop.f32.mrb[0].mxu0
        %v1779 = vadd.f32 0.0, %v1778
        %v1780 = vpop.f32.mrb[0].mxu0
        %1781 = vdwg.mxu0
        %1782 = vrot.lane.b32.xlu0 %v974, 104
        %v1783 = vpop.permute.xlu0 %1782
        %1784 = vrot.lane.b32.xlu0 %v974, 72
        %v1785 = vpop.permute.xlu0 %1784
        %v1787 = vsel %vm978, %v1783, 0
        %v1790 = vsel %vm978, %v1785, 0
        %1792 = vmatprep.subr.bf16.mxu0 0
        %1793 = vmatpush1.bf16.xpose.msra.mxu0 %v1790
        %1794 = vmatprep.subr.bf16.mxu0 0
        %1795 = vmatpush1.bf16.xpose.msra.mxu0 0
        %1796 = vmatprep.subr.bf16.mxu0 0
        %1797 = vmatpush1.bf16.xpose.msra.mxu0 0
        %1798 = vmatprep.subr.bf16.mxu0 0
        %1799 = vmatpush1.bf16.xpose.msra.mxu0 0
        %1800 = vmatprep.subr.bf16.mxu0 0
        %1801 = vmatpush1.bf16.xpose.msra.mxu0 0
        %1802 = vmatprep.subr.bf16.mxu0 0
        %1803 = vmatpush1.bf16.xpose.msra.mxu0 0
        %1804 = vmatprep.subr.bf16.mxu0 0
        %1805 = vmatpush1.bf16.xpose.msra.mxu0 0
        %1806 = vmatprep.subr.bf16.mxu0 0
        %1807 = vmatpush1.bf16.xpose.msra.mxu0 0
        %1808 = vmatprep.subr.bf16.mxu0 0
        %1809 = vmatpush1.bf16.xpose.msra.mxu0 0
        %1810 = vmatprep.subr.bf16.mxu0 0
        %1811 = vmatpush1.bf16.xpose.msra.mxu0 0
        %1812 = vmatprep.subr.bf16.mxu0 0
        %1813 = vmatpush1.bf16.xpose.msra.mxu0 0
        %1814 = vmatprep.subr.bf16.mxu0 0
        %1815 = vmatpush1.bf16.xpose.msra.mxu0 0
        %1816 = vmatprep.subr.bf16.mxu0 0
        %1817 = vmatpush1.bf16.xpose.msra.mxu0 0
        %1818 = vmatprep.subr.bf16.mxu0 0
        %1819 = vmatpush1.bf16.xpose.msra.mxu0 0
        %1820 = vmatprep.subr.bf16.mxu0 0
        %1821 = vmatpush1.bf16.xpose.msra.mxu0 0
        %1822 = vmatprep.subr.bf16.mxu0 0
        %1823 = vmatpush1.bf16.xpose.msra.mxu0 0
        %1824 = vmatprep.mubr.bf16.mxu0 0
        %1825 = vmatmul.mubr.bf16.gmra.mrb[0].mxu0 %v1787
        %v1826 = vpop.f32.mrb[0].mxu0
        %v1827 = vadd.f32 0.0, %v1826
        %v1828 = vpop.f32.mrb[0].mxu0
        %v1829 = vpop.f32.mrb[0].mxu0
        %v1830 = vadd.f32 0.0, %v1829
        %v1831 = vpop.f32.mrb[0].mxu0
        %1832 = vdwg.mxu0
        %v1833 = vsel %vm1076, %v1776, -inf
        %1834 = vmax.xlane.f32.xlu0 %v1833
        %v1835 = vpop.xlane.xlu0 %1834
        %v1836 = vsel %vm1076, %v1779, -inf
        %1837 = vmax.xlane.f32.xlu0 %v1836
        %v1838 = vpop.xlane.xlu0 %1837
        %v1839 = vsel %vm1076, %v1827, -inf
        %1840 = vmax.xlane.f32.xlu0 %v1839
        %v1841 = vpop.xlane.xlu0 %1840
        %v1842 = vsel %vm1076, %v1830, -inf
        %1843 = vmax.xlane.f32.xlu0 %v1842
        %v1844 = vpop.xlane.xlu0 %1843
        %v1845 = vsub.f32 %v1776, %v1835
        %v1846 = vsub.f32 %v1779, %v1838
        %v1847 = vsub.f32 %v1827, %v1841
        %v1848 = vsub.f32 %v1830, %v1844
        %v1849 = vmul.f32 %v1845, 1.442695
        %v1850 = vpow.pop %v1849
        %v1851 = vmul.f32 %v1846, 1.442695
        %v1852 = vpow.pop %v1851
        %v1853 = vmul.f32 %v1847, 1.442695
        %v1854 = vpow.pop %v1853
        %v1855 = vmul.f32 %v1848, 1.442695
        %v1856 = vpow.pop %v1855
        %v1857 = vsel %vm1076, %v1850, 0.0
        %1858 = vadd.xlane.f32.xlu0 %v1857
        %v1859 = vpop.xlane.xlu0 %1858
        %v1860 = vsel %vm1076, %v1852, 0.0
        %1861 = vadd.xlane.f32.xlu0 %v1860
        %v1862 = vpop.xlane.xlu0 %1861
        %v1863 = vsel %vm1076, %v1854, 0.0
        %1864 = vadd.xlane.f32.xlu0 %v1863
        %v1865 = vpop.xlane.xlu0 %1864
        %v1866 = vsel %vm1076, %v1856, 0.0
        %1867 = vadd.xlane.f32.xlu0 %v1866
        %v1868 = vpop.xlane.xlu0 %1867
        %v1869 = vrcp.pop %v1859
        %v1870 = vrcp.pop %v1862
        %v1871 = vrcp.pop %v1865
        %v1872 = vrcp.pop %v1868
        %v1873 = vmul.f32 %v1850, %v1869
        %v1874 = vmul.f32 %v1852, %v1870
        %v1875 = vmul.f32 %v1854, %v1871
        %v1876 = vmul.f32 %v1856, %v1872
        %v1877 = vpack.c.bf16 %v1874, %v1873
        %v1878 = vpack.c.bf16 %v1876, %v1875
        %1879 = vrot.lane.b32.xlu0 %v973, 40
        %v1880 = vpop.permute.xlu0 %1879
        %v1883 = vsel %vm1076, %v1877, 0
        %1885 = vmatprep.subr.bf16.mxu0 0
        %1886 = vmatpush1.bf16.msra.mxu0 %v1880
        %1887 = vmatprep.subr.bf16.mxu0 0
        %1888 = vmatpush1.bf16.msra.mxu0 0
        %1889 = vmatprep.subr.bf16.mxu0 0
        %1890 = vmatpush1.bf16.msra.mxu0 0
        %1891 = vmatprep.subr.bf16.mxu0 0
        %1892 = vmatpush1.bf16.msra.mxu0 0
        %1893 = vmatprep.subr.bf16.mxu0 0
        %1894 = vmatpush1.bf16.msra.mxu0 0
        %1895 = vmatprep.subr.bf16.mxu0 0
        %1896 = vmatpush1.bf16.msra.mxu0 0
        %1897 = vmatprep.subr.bf16.mxu0 0
        %1898 = vmatpush1.bf16.msra.mxu0 0
        %1899 = vmatprep.subr.bf16.mxu0 0
        %1900 = vmatpush1.bf16.msra.mxu0 0
        %1901 = vmatprep.subr.bf16.mxu0 0
        %1902 = vmatpush1.bf16.msra.mxu0 0
        %1903 = vmatprep.subr.bf16.mxu0 0
        %1904 = vmatpush1.bf16.msra.mxu0 0
        %1905 = vmatprep.subr.bf16.mxu0 0
        %1906 = vmatpush1.bf16.msra.mxu0 0
        %1907 = vmatprep.subr.bf16.mxu0 0
        %1908 = vmatpush1.bf16.msra.mxu0 0
        %1909 = vmatprep.subr.bf16.mxu0 0
        %1910 = vmatpush1.bf16.msra.mxu0 0
        %1911 = vmatprep.subr.bf16.mxu0 0
        %1912 = vmatpush1.bf16.msra.mxu0 0
        %1913 = vmatprep.subr.bf16.mxu0 0
        %1914 = vmatpush1.bf16.msra.mxu0 0
        %1915 = vmatprep.subr.bf16.mxu0 0
        %1916 = vmatpush1.bf16.msra.mxu0 0
        %1917 = vmatprep.mubr.bf16.mxu0 0
        %1918 = vmatmul.mubr.bf16.gmra.mrb[0].mxu0 %v1883
        %v1919 = vpop.f32.mrb[0].mxu0
        %v1920 = vadd.f32 0.0, %v1919
        %v1921 = vpop.f32.mrb[0].mxu0
        %v1922 = vpop.f32.mrb[0].mxu0
        %v1923 = vadd.f32 0.0, %v1922
        %v1924 = vpop.f32.mrb[0].mxu0
        %1925 = vdwg.mxu0
        %1926 = vrot.lane.b32.xlu0 %v974, 40
        %v1927 = vpop.permute.xlu0 %1926
        %v1930 = vsel %vm1076, %v1878, 0
        %1932 = vmatprep.subr.bf16.mxu0 0
        %1933 = vmatpush1.bf16.msra.mxu0 %v1927
        %1934 = vmatprep.subr.bf16.mxu0 0
        %1935 = vmatpush1.bf16.msra.mxu0 0
        %1936 = vmatprep.subr.bf16.mxu0 0
        %1937 = vmatpush1.bf16.msra.mxu0 0
        %1938 = vmatprep.subr.bf16.mxu0 0
        %1939 = vmatpush1.bf16.msra.mxu0 0
        %1940 = vmatprep.subr.bf16.mxu0 0
        %1941 = vmatpush1.bf16.msra.mxu0 0
        %1942 = vmatprep.subr.bf16.mxu0 0
        %1943 = vmatpush1.bf16.msra.mxu0 0
        %1944 = vmatprep.subr.bf16.mxu0 0
        %1945 = vmatpush1.bf16.msra.mxu0 0
        %1946 = vmatprep.subr.bf16.mxu0 0
        %1947 = vmatpush1.bf16.msra.mxu0 0
        %1948 = vmatprep.subr.bf16.mxu0 0
        %1949 = vmatpush1.bf16.msra.mxu0 0
        %1950 = vmatprep.subr.bf16.mxu0 0
        %1951 = vmatpush1.bf16.msra.mxu0 0
        %1952 = vmatprep.subr.bf16.mxu0 0
        %1953 = vmatpush1.bf16.msra.mxu0 0
        %1954 = vmatprep.subr.bf16.mxu0 0
        %1955 = vmatpush1.bf16.msra.mxu0 0
        %1956 = vmatprep.subr.bf16.mxu0 0
        %1957 = vmatpush1.bf16.msra.mxu0 0
        %1958 = vmatprep.subr.bf16.mxu0 0
        %1959 = vmatpush1.bf16.msra.mxu0 0
        %1960 = vmatprep.subr.bf16.mxu0 0
        %1961 = vmatpush1.bf16.msra.mxu0 0
        %1962 = vmatprep.subr.bf16.mxu0 0
        %1963 = vmatpush1.bf16.msra.mxu0 0
        %1964 = vmatprep.mubr.bf16.mxu0 0
        %1965 = vmatmul.mubr.bf16.gmra.mrb[0].mxu0 %v1930
        %v1966 = vpop.f32.mrb[0].mxu0
        %v1967 = vadd.f32 0.0, %v1966
        %v1968 = vpop.f32.mrb[0].mxu0
        %v1969 = vpop.f32.mrb[0].mxu0
        %v1970 = vadd.f32 0.0, %v1969
        %v1971 = vpop.f32.mrb[0].mxu0
        %1972 = vdwg.mxu0
        %v1973 = vpack.c.bf16 %v1923, %v1920
        %v1974 = vpack.c.bf16 %v1970, %v1967
        %1977 = vrot.lane.b32.xlu0 %v1973, 24
        %v1978 = vpop.permute.xlu0 %1977
        %1979 = vrot.lane.b32.xlu0 %v1974, 24
        %v1980 = vpop.permute.xlu0 %1979
        %vm1983 = vcmask 261312
        %1984 = vst.msk [vmem:[#allocation3] sm:$0xff] %vm1983, %v1978
        %1985 = vst.msk [vmem:[#allocation3 + $0x8] sm:$0xff] %vm1983, %v1980
        %v1986 = vld [vmem:[#allocation3] sm:$0xff]
        %v1987 = vld [vmem:[#allocation3 + $0x8] sm:$0xff]
        %v1988 = vld [vmem:[%s667] sm:$0xf]
        %v1989 = vld [vmem:[%s667 + $0x4] sm:$0xf]
        %v1990 = vld [vmem:[%s667 + $0x8] sm:$0xf]
        %v1991 = vld [vmem:[%s667 + $0xc] sm:$0xf]
        %v1996 = vunpack.c.l.b16 %v1988
        %v1997 = vunpack.c.l.b16 %v1989
        %v1998 = vunpack.c.l.b16 %v1990
        %v1999 = vunpack.c.l.b16 %v1991
        %v2000 = vpack.c.b16 %v1997, %v1996
        %v2001 = vpack.c.b16 %v1999, %v1998
        %v2005 = vsel %vm826, %v1986, 0
        %v2008 = vsel %vm826, %v1987, 0
        %2010 = vmatprep.subr.bf16.mxu0 0
        %2011 = vmatpush1.bf16.msra.mxu0 %v2000
        %2012 = vmatprep.subr.bf16.mxu0 0
        %2013 = vmatpush1.bf16.msra.mxu0 %v2001
        %2014 = vmatprep.subr.bf16.mxu0 0
        %2015 = vmatpush1.bf16.msra.mxu0 0
        %2016 = vmatprep.subr.bf16.mxu0 0
        %2017 = vmatpush1.bf16.msra.mxu0 0
        %2018 = vmatprep.subr.bf16.mxu0 0
        %2019 = vmatpush1.bf16.msra.mxu0 0
        %2020 = vmatprep.subr.bf16.mxu0 0
        %2021 = vmatpush1.bf16.msra.mxu0 0
        %2022 = vmatprep.subr.bf16.mxu0 0
        %2023 = vmatpush1.bf16.msra.mxu0 0
        %2024 = vmatprep.subr.bf16.mxu0 0
        %2025 = vmatpush1.bf16.msra.mxu0 0
        %2026 = vmatprep.subr.bf16.mxu0 0
        %2027 = vmatpush1.bf16.msra.mxu0 0
        %2028 = vmatprep.subr.bf16.mxu0 0
        %2029 = vmatpush1.bf16.msra.mxu0 0
        %2030 = vmatprep.subr.bf16.mxu0 0
        %2031 = vmatpush1.bf16.msra.mxu0 0
        %2032 = vmatprep.subr.bf16.mxu0 0
        %2033 = vmatpush1.bf16.msra.mxu0 0
        %2034 = vmatprep.subr.bf16.mxu0 0
        %2035 = vmatpush1.bf16.msra.mxu0 0
        %2036 = vmatprep.subr.bf16.mxu0 0
        %2037 = vmatpush1.bf16.msra.mxu0 0
        %2038 = vmatprep.subr.bf16.mxu0 0
        %2039 = vmatpush1.bf16.msra.mxu0 0
        %2040 = vmatprep.subr.bf16.mxu0 0
        %2041 = vmatpush1.bf16.msra.mxu0 0
        %2042 = vmatprep.mubr.bf16.mxu0 0
        %2043 = vmatmul.mubr.bf16.gmra.mrb[0].mxu0 %v2005
        %v2044 = vpop.f32.mrb[0].mxu0
        %v2045 = vadd.f32 0.0, %v2044
        %v2046 = vpop.f32.mrb[0].mxu0
        %v2047 = vpop.f32.mrb[0].mxu0
        %v2048 = vadd.f32 0.0, %v2047
        %v2049 = vpop.f32.mrb[0].mxu0
        %2050 = vmatprep.mubr.bf16.mxu0 0
        %2051 = vmatmul.mubr.bf16.gmra.mrb[0].mxu0 %v2008
        %v2052 = vpop.f32.mrb[0].mxu0
        %v2053 = vadd.f32 0.0, %v2052
        %v2054 = vpop.f32.mrb[0].mxu0
        %v2055 = vpop.f32.mrb[0].mxu0
        %v2056 = vadd.f32 0.0, %v2055
        %v2057 = vpop.f32.mrb[0].mxu0
        %2058 = vdwg.mxu0
        %v2059 = vadd.f32 %v820, %v2045
        %v2060 = vadd.f32 %v821, %v2048
        %v2061 = vadd.f32 %v822, %v2053
        %v2062 = vadd.f32 %v823, %v2056
        %v2063 = vld [vmem:[%s675] sm:$0x1]
        %v2065 = vlaneseq
        %v2066 = vshrl.u32 %v2065, 7
        %v2067 = vsub.s32 0, %v2066
        %v2068 = vrot.slane %v2063, %v2067
        %v2070 = vadd.f32 %v2059, %v2068
        %v2071 = vadd.f32 %v2060, %v2068
        %v2072 = vadd.f32 %v2061, %v2068
        %v2073 = vadd.f32 %v2062, %v2068
        %v2074 = vld [vmem:[%s683] sm:$0x1]
        %v2075 = vld [vmem:[%s691] sm:$0x1]
        %v2076 = vsel %vm826, %v2070, 0.0
        %2077 = vadd.xlane.f32.xlu0 %v2076
        %v2078 = vpop.xlane.xlu0 %2077
        %v2079 = vsel %vm826, %v2071, 0.0
        %2080 = vadd.xlane.f32.xlu0 %v2079
        %v2081 = vpop.xlane.xlu0 %2080
        %v2082 = vsel %vm826, %v2072, 0.0
        %2083 = vadd.xlane.f32.xlu0 %v2082
        %v2084 = vpop.xlane.xlu0 %2083
        %v2085 = vsel %vm826, %v2073, 0.0
        %2086 = vadd.xlane.f32.xlu0 %v2085
        %v2087 = vpop.xlane.xlu0 %2086
        %v2088 = vmul.f32 %v2078, %v839
        %v2089 = vmul.f32 %v2081, %v839
        %v2090 = vmul.f32 %v2084, %v839
        %v2091 = vmul.f32 %v2087, %v839
        %v2092 = vsub.f32 %v2070, %v2088
        %v2093 = vsub.f32 %v2071, %v2089
        %v2094 = vsub.f32 %v2072, %v2090
        %v2095 = vsub.f32 %v2073, %v2091
        %v2096 = vmul.f32 %v2092, %v2092
        %v2097 = vmul.f32 %v2093, %v2093
        %v2098 = vmul.f32 %v2094, %v2094
        %v2099 = vmul.f32 %v2095, %v2095
        %v2100 = vsel %vm826, %v2096, 0.0
        %2101 = vadd.xlane.f32.xlu0 %v2100
        %v2102 = vpop.xlane.xlu0 %2101
        %v2103 = vsel %vm826, %v2097, 0.0
        %2104 = vadd.xlane.f32.xlu0 %v2103
        %v2105 = vpop.xlane.xlu0 %2104
        %v2106 = vsel %vm826, %v2098, 0.0
        %2107 = vadd.xlane.f32.xlu0 %v2106
        %v2108 = vpop.xlane.xlu0 %2107
        %v2109 = vsel %vm826, %v2099, 0.0
        %2110 = vadd.xlane.f32.xlu0 %v2109
        %v2111 = vpop.xlane.xlu0 %2110
        %v2112 = vmul.f32 %v2102, %v839
        %v2113 = vmul.f32 %v2105, %v839
        %v2114 = vmul.f32 %v2108, %v839
        %v2115 = vmul.f32 %v2111, %v839
        %v2116 = vadd.f32 %v2112, 1e-05
        %v2117 = vadd.f32 %v2113, 1e-05
        %v2118 = vadd.f32 %v2114, 1e-05
        %v2119 = vadd.f32 %v2115, 1e-05
        %v2120 = vrsqrt.pop %v2116
        %v2121 = vrsqrt.pop %v2117
        %v2122 = vrsqrt.pop %v2118
        %v2123 = vrsqrt.pop %v2119
        %v2124 = vmul.f32 %v2092, %v2120
        %v2125 = vmul.f32 %v2093, %v2121
        %v2126 = vmul.f32 %v2094, %v2122
        %v2127 = vmul.f32 %v2095, %v2123
        %v2129 = vlaneseq
        %v2130 = vshrl.u32 %v2129, 7
        %v2131 = vsub.s32 0, %v2130
        %v2132 = vrot.slane %v2074, %v2131
        %v2134 = vmul.f32 %v2124, %v2132
        %v2135 = vmul.f32 %v2125, %v2132
        %v2136 = vmul.f32 %v2126, %v2132
        %v2137 = vmul.f32 %v2127, %v2132
        %v2139 = vlaneseq
        %v2140 = vshrl.u32 %v2139, 7
        %v2141 = vsub.s32 0, %v2140
        %v2142 = vrot.slane %v2075, %v2141
        %v2144 = vadd.f32 %v2134, %v2142
        %v2145 = vadd.f32 %v2135, %v2142
        %v2146 = vadd.f32 %v2136, %v2142
        %v2147 = vadd.f32 %v2137, %v2142
        %v2148 = vpack.c.bf16 %v2145, %v2144
        %v2149 = vpack.c.bf16 %v2147, %v2146
        %v2150 = vld [vmem:[%s700] sm:$0xf]
        %v2151 = vld [vmem:[%s700 + $0x4] sm:$0xf]
        %v2152 = vld [vmem:[%s700 + $0x8] sm:$0xf]
        %v2153 = vld [vmem:[%s700 + $0xc] sm:$0xf]
        %v2154 = vld [vmem:[%s708] sm:$0x1]
        %v2156 = vlaneseq
        %v2157 = vshrl.u32 %v2156, 7
        %v2158 = vsub.s32 0, %v2157
        %v2159 = vrot.slane %v2154, %v2158
        %v2165 = vunpack.c.l.b16 %v2150
        %v2166 = vunpack.c.l.b16 %v2151
        %v2167 = vunpack.c.l.b16 %v2152
        %v2168 = vunpack.c.l.b16 %v2153
        %v2169 = vpack.c.b16 %v2166, %v2165
        %v2170 = vpack.c.b16 %v2168, %v2167
        %v2174 = vsel %vm826, %v2148, 0
        %v2177 = vsel %vm826, %v2149, 0
        %2179 = vmatprep.subr.bf16.mxu0 0
        %2180 = vmatpush1.bf16.msra.mxu0 %v2169
        %2181 = vmatprep.subr.bf16.mxu0 0
        %2182 = vmatpush1.bf16.msra.mxu0 %v2170
        %2183 = vmatprep.subr.bf16.mxu0 0
        %2184 = vmatpush1.bf16.msra.mxu0 0
        %2185 = vmatprep.subr.bf16.mxu0 0
        %2186 = vmatpush1.bf16.msra.mxu0 0
        %2187 = vmatprep.subr.bf16.mxu0 0
        %2188 = vmatpush1.bf16.msra.mxu0 0
        %2189 = vmatprep.subr.bf16.mxu0 0
        %2190 = vmatpush1.bf16.msra.mxu0 0
        %2191 = vmatprep.subr.bf16.mxu0 0
        %2192 = vmatpush1.bf16.msra.mxu0 0
        %2193 = vmatprep.subr.bf16.mxu0 0
        %2194 = vmatpush1.bf16.msra.mxu0 0
        %2195 = vmatprep.subr.bf16.mxu0 0
        %2196 = vmatpush1.bf16.msra.mxu0 0
        %2197 = vmatprep.subr.bf16.mxu0 0
        %2198 = vmatpush1.bf16.msra.mxu0 0
        %2199 = vmatprep.subr.bf16.mxu0 0
        %2200 = vmatpush1.bf16.msra.mxu0 0
        %2201 = vmatprep.subr.bf16.mxu0 0
        %2202 = vmatpush1.bf16.msra.mxu0 0
        %2203 = vmatprep.subr.bf16.mxu0 0
        %2204 = vmatpush1.bf16.msra.mxu0 0
        %2205 = vmatprep.subr.bf16.mxu0 0
        %2206 = vmatpush1.bf16.msra.mxu0 0
        %2207 = vmatprep.subr.bf16.mxu0 0
        %2208 = vmatpush1.bf16.msra.mxu0 0
        %2209 = vmatprep.subr.bf16.mxu0 0
        %2210 = vmatpush1.bf16.msra.mxu0 0
        %2211 = vmatprep.mubr.bf16.mxu0 0
        %2212 = vmatmul.mubr.bf16.gmra.mrb[0].mxu0 %v2174
        %v2213 = vpop.f32.mrb[0].mxu0
        %v2214 = vadd.f32 %v2159, %v2213
        %v2215 = vpop.f32.mrb[0].mxu0
        %v2216 = vpop.f32.mrb[0].mxu0
        %v2217 = vadd.f32 %v2159, %v2216
        %v2218 = vpop.f32.mrb[0].mxu0
        %2219 = vmatprep.mubr.bf16.mxu0 0
        %2220 = vmatmul.mubr.bf16.gmra.mrb[0].mxu0 %v2177
        %v2221 = vpop.f32.mrb[0].mxu0
        %v2222 = vadd.f32 %v2159, %v2221
        %v2223 = vpop.f32.mrb[0].mxu0
        %v2224 = vpop.f32.mrb[0].mxu0
        %v2225 = vadd.f32 %v2159, %v2224
        %v2226 = vpop.f32.mrb[0].mxu0
        %2227 = vdwg.mxu0
        %v2228 = vmul.f32 %v2214, 0.5
        %v2229 = vmul.f32 %v2217, 0.5
        %v2230 = vmul.f32 %v2222, 0.5
        %v2231 = vmul.f32 %v2225, 0.5
        %v2232 = vmul.f32 %v2214, 0.044715
        %v2233 = vmul.f32 %v2217, 0.044715
        %v2234 = vmul.f32 %v2222, 0.044715
        %v2235 = vmul.f32 %v2225, 0.044715
        %v2236 = vmul.f32 %v2232, %v2214
        %v2237 = vmul.f32 %v2233, %v2217
        %v2238 = vmul.f32 %v2234, %v2222
        %v2239 = vmul.f32 %v2235, %v2225
        %v2240 = vmul.f32 %v2236, %v2214
        %v2241 = vmul.f32 %v2237, %v2217
        %v2242 = vmul.f32 %v2238, %v2222
        %v2243 = vmul.f32 %v2239, %v2225
        %v2244 = vadd.f32 %v2214, %v2240
        %v2245 = vadd.f32 %v2217, %v2241
        %v2246 = vadd.f32 %v2222, %v2242
        %v2247 = vadd.f32 %v2225, %v2243
        %v2248 = vmul.f32 %v2244, 0.7978846
        %v2249 = vmul.f32 %v2245, 0.7978846
        %v2250 = vmul.f32 %v2246, 0.7978846
        %v2251 = vmul.f32 %v2247, 0.7978846
        %v2252 = vtanh.pop %v2248
        %v2253 = vtanh.pop %v2249
        %v2254 = vtanh.pop %v2250
        %v2255 = vtanh.pop %v2251
        %v2256 = vadd.f32 %v2252, 1.0
        %v2257 = vadd.f32 %v2253, 1.0
        %v2258 = vadd.f32 %v2254, 1.0
        %v2259 = vadd.f32 %v2255, 1.0
        %v2260 = vmul.f32 %v2228, %v2256
        %v2261 = vmul.f32 %v2229, %v2257
        %v2262 = vmul.f32 %v2230, %v2258
        %v2263 = vmul.f32 %v2231, %v2259
        %v2264 = vpack.c.bf16 %v2261, %v2260
        %v2265 = vpack.c.bf16 %v2263, %v2262
        %v2266 = vld [vmem:[%s717] sm:$0xf]
        %v2267 = vld [vmem:[%s717 + $0x4] sm:$0xf]
        %v2268 = vld [vmem:[%s717 + $0x8] sm:$0xf]
        %v2269 = vld [vmem:[%s717 + $0xc] sm:$0xf]
        %v2270 = vld [vmem:[%s717 + $0x10] sm:$0xf]
        %v2271 = vld [vmem:[%s717 + $0x14] sm:$0xf]
        %v2272 = vld [vmem:[%s717 + $0x18] sm:$0xf]
        %v2273 = vld [vmem:[%s717 + $0x1c] sm:$0xf]
        %v2274 = vld [vmem:[%s717 + $0x20] sm:$0xf]
        %v2275 = vld [vmem:[%s717 + $0x24] sm:$0xf]
        %v2276 = vld [vmem:[%s717 + $0x28] sm:$0xf]
        %v2277 = vld [vmem:[%s717 + $0x2c] sm:$0xf]
        %v2278 = vld [vmem:[%s717 + $0x30] sm:$0xf]
        %v2279 = vld [vmem:[%s717 + $0x34] sm:$0xf]
        %v2280 = vld [vmem:[%s717 + $0x38] sm:$0xf]
        %v2281 = vld [vmem:[%s717 + $0x3c] sm:$0xf]
        %v2282 = vld [vmem:[%s725] sm:$0x1]
        %v2284 = vlaneseq
        %v2285 = vshrl.u32 %v2284, 7
        %v2286 = vsub.s32 0, %v2285
        %v2287 = vrot.slane %v2282, %v2286
        %v2305 = vunpack.c.l.b16 %v2266
        %v2306 = vunpack.c.l.b16 %v2267
        %v2307 = vunpack.c.l.b16 %v2268
        %v2308 = vunpack.c.l.b16 %v2269
        %v2309 = vunpack.c.l.b16 %v2270
        %v2310 = vunpack.c.l.b16 %v2271
        %v2311 = vunpack.c.l.b16 %v2272
        %v2312 = vunpack.c.l.b16 %v2273
        %v2313 = vunpack.c.l.b16 %v2274
        %v2314 = vunpack.c.l.b16 %v2275
        %v2315 = vunpack.c.l.b16 %v2276
        %v2316 = vunpack.c.l.b16 %v2277
        %v2317 = vunpack.c.l.b16 %v2278
        %v2318 = vunpack.c.l.b16 %v2279
        %v2319 = vunpack.c.l.b16 %v2280
        %v2320 = vunpack.c.l.b16 %v2281
        %v2321 = vpack.c.b16 %v2306, %v2305
        %v2322 = vpack.c.b16 %v2308, %v2307
        %v2323 = vpack.c.b16 %v2310, %v2309
        %v2324 = vpack.c.b16 %v2312, %v2311
        %v2325 = vpack.c.b16 %v2314, %v2313
        %v2326 = vpack.c.b16 %v2316, %v2315
        %v2327 = vpack.c.b16 %v2318, %v2317
        %v2328 = vpack.c.b16 %v2320, %v2319
        %2337 = vmatprep.subr.bf16.mxu0 0
        %2338 = vmatpush1.bf16.msra.mxu0 %v2321
        %2339 = vmatprep.subr.bf16.mxu0 0
        %2340 = vmatpush1.bf16.msra.mxu0 %v2322
        %2341 = vmatprep.subr.bf16.mxu0 0
        %2342 = vmatpush1.bf16.msra.mxu0 %v2323
        %2343 = vmatprep.subr.bf16.mxu0 0
        %2344 = vmatpush1.bf16.msra.mxu0 %v2324
        %2345 = vmatprep.subr.bf16.mxu0 0
        %2346 = vmatpush1.bf16.msra.mxu0 %v2325
        %2347 = vmatprep.subr.bf16.mxu0 0
        %2348 = vmatpush1.bf16.msra.mxu0 %v2326
        %2349 = vmatprep.subr.bf16.mxu0 0
        %2350 = vmatpush1.bf16.msra.mxu0 %v2327
        %2351 = vmatprep.subr.bf16.mxu0 0
        %2352 = vmatpush1.bf16.msra.mxu0 %v2328
        %2353 = vmatprep.subr.bf16.mxu0 0
        %2354 = vmatpush1.bf16.msra.mxu0 0
        %2355 = vmatprep.subr.bf16.mxu0 0
        %2356 = vmatpush1.bf16.msra.mxu0 0
        %2357 = vmatprep.subr.bf16.mxu0 0
        %2358 = vmatpush1.bf16.msra.mxu0 0
        %2359 = vmatprep.subr.bf16.mxu0 0
        %2360 = vmatpush1.bf16.msra.mxu0 0
        %2361 = vmatprep.subr.bf16.mxu0 0
        %2362 = vmatpush1.bf16.msra.mxu0 0
        %2363 = vmatprep.subr.bf16.mxu0 0
        %2364 = vmatpush1.bf16.msra.mxu0 0
        %2365 = vmatprep.subr.bf16.mxu0 0
        %2366 = vmatpush1.bf16.msra.mxu0 0
        %2367 = vmatprep.subr.bf16.mxu0 0
        %2368 = vmatpush1.bf16.msra.mxu0 0
        %2369 = vmatprep.mubr.bf16.mxu0 0
        %2370 = vmatmul.mubr.bf16.gmra.mrb[0].mxu0 %v2264
        %v2371 = vpop.f32.mrb[0].mxu0
        %v2372 = vadd.f32 %v2287, %v2371
        %v2373 = vpop.f32.mrb[0].mxu0
        %v2374 = vpop.f32.mrb[0].mxu0
        %v2375 = vadd.f32 %v2287, %v2374
        %v2376 = vpop.f32.mrb[0].mxu0
        %2377 = vmatprep.mubr.bf16.mxu0 0
        %2378 = vmatmul.mubr.bf16.gmra.mrb[0].mxu0 %v2265
        %v2379 = vpop.f32.mrb[0].mxu0
        %v2380 = vadd.f32 %v2287, %v2379
        %v2381 = vpop.f32.mrb[0].mxu0
        %v2382 = vpop.f32.mrb[0].mxu0
        %v2383 = vadd.f32 %v2287, %v2382
        %v2384 = vpop.f32.mrb[0].mxu0
        %2385 = vdwg.mxu0
        %v2386 = vadd.f32 %v2070, %v2372
        %v2387 = vadd.f32 %v2071, %v2375
        %v2388 = vadd.f32 %v2072, %v2380
        %v2389 = vadd.f32 %v2073, %v2383
        %2390 = vst.msk [vmem:[#allocation2] sm:$0xff] %vm826, %v2386
        %2391 = vst.msk [vmem:[#allocation2 + $0x8] sm:$0xff] %vm826, %v2387
        %2392 = vst.msk [vmem:[#allocation2 + $0x10] sm:$0xff] %vm826, %v2388
        %2393 = vst.msk [vmem:[#allocation2 + $0x18] sm:$0xff] %vm826, %v2389
        %p2394 = scmp.eq.s32.totalorder %s48, 1
        // Predicated region
        $region121: #{tpu_custom_call.1} parent=67 // pred_check
          %p2395 = pneg %p2394
        $region122: #{tpu_custom_call.1} parent=67 // pred_check_branch
          %2397 = sbr.rel (%p2395) target = $region124
        $region123: #{tpu_custom_call.1} parent=67 // pred_region
          %v2398 = vld [vmem:[#allocation2] sm:$0xff]
          %v2399 = vld [vmem:[#allocation2 + $0x8] sm:$0xff]
          %v2400 = vld [vmem:[#allocation2 + $0x10] sm:$0xff]
          %v2401 = vld [vmem:[#allocation2 + $0x18] sm:$0xff]
          %2402 = vst.msk [vmem:[#allocation24] sm:$0xff] %vm826, %v2398
          %2403 = vst.msk [vmem:[#allocation24 + $0x8] sm:$0xff] %vm826, %v2399
          %2404 = vst.msk [vmem:[#allocation24 + $0x10] sm:$0xff] %vm826, %v2400
          %2405 = vst.msk [vmem:[#allocation24 + $0x18] sm:$0xff] %vm826, %v2401
        $region124: #{tpu_custom_call.1} parent=67 // pred_fallthru
          _
        // Predicated region
        $region125: #{tpu_custom_call.1} parent=67 // pred_check
          %p2406 = pneg %p385
        $region126: #{tpu_custom_call.1} parent=67 // pred_check_branch
          %2408 = sbr.rel (%p2406) target = $region128
        $region127: #{tpu_custom_call.1} parent=67 // pred_region
          %s2409 = smul.u32 2, %s47
          %s2411 = ssub.s32 512, 512
          %2412 = vsyncadd [#allocation6], %s2411
          %s2413 = smul.addr %s2409, 2
          %s2414 = smul.addr %s2413, 128
          %s2415 = scalar_lea.hbm %s12, %s2414
          %s2416 = sshll.u32 [#allocation24], 4
          %s2417 = int_to_ptr.vmem [resolvable:$true] %s2416
          %2422 = dma.vmem_to_hbm [thread:$0]  %s2417, 512, %s2415, [#allocation6], 128, 128, 8
        $region128: #{tpu_custom_call.1} parent=67 // pred_fallthru
          _
        // Predicated region
        $region129: #{tpu_custom_call.1} parent=67 // pred_check
          %p2423 = pneg %p385
        $region130: #{tpu_custom_call.1} parent=67 // pred_check_branch
          %2425 = sbr.rel (%p2423) target = $region132
        $region131: #{tpu_custom_call.1} parent=67 // pred_region
          %2426 = dma.done [#allocation6], 512
        $region132: #{tpu_custom_call.1} parent=67 // pred_fallthru
          _
      $region68: #{tpu_custom_call.1} parent=5 // pred_fallthru
        _
      %p2427 = scmp.le.s32.totalorder 2, %s38
      // Predicated region
      $region133: #{tpu_custom_call.1} parent=5 // pred_check
        %p2428 = pneg %p2427
      $region134: #{tpu_custom_call.1} parent=5 // pred_check_branch
        %2430 = sbr.rel (%p2428) target = $region136
      $region135: #{tpu_custom_call.1} parent=5 // pred_region
        %s2431 = ssub.s32 %s38, 2
      $region136: #{tpu_custom_call.1} parent=5 // pred_fallthru
        _
    $region6: #{tpu_custom_call.1} parent=1 // loop_footer
      %s42 = sadd.s32 1, %s38
    $region7: #{tpu_custom_call.1} parent=1 // loop_footer_branch
      %37 = sbr.rel target = $region3
    $region8: #{tpu_custom_call.1} parent=1 // loop_exit
      _
    %2432 = vsyncpa [#allocation5], 1
    %s2433 = scalar_lea.sflag [#allocation5], 1
    %2434 = vsyncpa %s2433, 1
    %2435 = vsyncpa [#allocation8], 1
    %s2436 = scalar_lea.sflag [#allocation8], 1
    %2437 = vsyncpa %s2436, 1
    %2438 = vsyncpa [#allocation11], 1
    %s2439 = scalar_lea.sflag [#allocation11], 1
    %2440 = vsyncpa %s2439, 1
    %2441 = vsyncpa [#allocation14], 1
    %s2442 = scalar_lea.sflag [#allocation14], 1
    %2443 = vsyncpa %s2442, 1
    %2444 = vsyncpa [#allocation17], 1
    %s2445 = scalar_lea.sflag [#allocation17], 1
    %2446 = vsyncpa %s2445, 1
    %2447 = vsyncpa [#allocation20], 1
    %s2448 = scalar_lea.sflag [#allocation20], 1
    %2449 = vsyncpa %s2448, 1
    %2450 = vsyncpa [#allocation23], 1
    %s2451 = scalar_lea.sflag [#allocation23], 1
    %2452 = vsyncpa %s2451, 1
    %2453 = vsyncpa [#allocation6], 1
    %s2454 = scalar_lea.sflag [#allocation6], 1
    %2455 = vsyncpa %s2454, 1

</llo_original>
